<compile_context>
chip_gen: v7x
topology: tpu7x:2x2x1
jax: 0.10.0
libtpu: 0.0.40
codegen_flags: <defaults>
</compile_context>

<pallas_src>
import functools

import jax
import jax.numpy as jnp
from jax.experimental import pallas as pl
from jax.experimental.pallas import tpu as pltpu


def gconv_lstm_decoder_kernel(a_ref, h_ref, c_ref, wd_ref, bd_ref,
                              wx_ref, wh_ref, bc_ref,
                              out_ref, h_sc, c_sc, z0_sc, *, H, O):
    f32 = jnp.float32
    t = pl.program_id(0)
    A = a_ref[...]                                        # [N, N] normalized adjacency

    @pl.when(t == 0)
    def _init():
        h = h_ref[...]                                    # [N, H]
        c = c_ref[...]                                    # [N, H]
        # _init_states: GCNConv(cat(h, c)) without lane-axis concat (row-split Wd).
        xw = (jnp.dot(h, wd_ref[:H, :], preferred_element_type=f32)
              + jnp.dot(c, wd_ref[H:, :], preferred_element_type=f32))   # [N, 2O]
        s = jnp.dot(A, xw, preferred_element_type=f32) + bd_ref[...]     # [N, 2O]
        # ELU(alpha=1); clamp the exp argument so the dead branch never makes inf/NaN.
        s = jnp.where(s > 0, s, jnp.exp(jnp.minimum(s, 0.0)) - 1.0)
        h_sc[...] = s[:, :O]
        c_sc[...] = s[:, O:]
        # Hoisted time-invariant cell term (bias folded in):
        #   z0_g = (A @ h) @ Wx_g + bc_g
        ah0 = jnp.dot(A, h, preferred_element_type=f32)                  # [N, H]
        for g in range(4):
            z0_sc[g, :, :] = (jnp.dot(ah0, wx_ref[g], preferred_element_type=f32)
                              + bc_ref[g])

    # One recurrent step per grid iteration:
    #   z_g = (A @ h_t) @ Wh_g + z0_g   (reassociated; N^2*O instead of N^2*4O)
    h_t = h_sc[...]                                       # [N, O]
    c_t = c_sc[...]                                       # [N, O]
    ah = jnp.dot(A, h_t, preferred_element_type=f32)      # [N, O]
    i_g = jax.nn.sigmoid(jnp.dot(ah, wh_ref[0], preferred_element_type=f32) + z0_sc[0])
    f_g = jax.nn.sigmoid(jnp.dot(ah, wh_ref[1], preferred_element_type=f32) + z0_sc[1])
    o_g = jax.nn.sigmoid(jnp.dot(ah, wh_ref[2], preferred_element_type=f32) + z0_sc[2])
    g_g = jnp.tanh(jnp.dot(ah, wh_ref[3], preferred_element_type=f32) + z0_sc[3])
    c_n = f_g * c_t + i_g * g_g
    h_n = o_g * jnp.tanh(c_n)
    c_sc[...] = c_n
    h_sc[...] = h_n
    out_ref[0] = h_n.astype(out_ref.dtype)


def gcn_norm_dense(edge_index, edge_weight, num_nodes):
    """Dense replica of PyG gcn_norm (add_self_loops=True, fill=1).

    Assumes edge_index contains no pre-existing self loops (PyG replaces them with
    fill-value self loops anyway); duplicate edges are summed, matching scatter-add.
    """
    src, dst = edge_index[0], edge_index[1]
    A = jnp.zeros((num_nodes, num_nodes), jnp.float32)
    A = A.at[dst, src].add(edge_weight.astype(jnp.float32))   # message j -> i in A[i, j]
    A = A + jnp.eye(num_nodes, dtype=jnp.float32)             # self loops, weight 1
    deg = jnp.sum(A, axis=1)                                  # weighted in-degree
    dinv = jnp.where(deg > 0, jax.lax.rsqrt(deg), 0.0)
    return dinv[:, None] * A * dinv[None, :]


def gconv_lstm_decoder(h, c, edge_index, edge_attr, seq_len, params):
    N, H = h.shape
    O = params["O"]
    A = gcn_norm_dense(edge_index, edge_attr, N)

    # Pre-split the cell GCNConv weights per gate (lane-aligned blocks, no in-loop
    # column slicing).  W_cell is stored transposed as [H+O, 4O].
    W_cell = params["W_cell"]
    Wx = W_cell[:H, :].reshape(H, 4, O).transpose(1, 0, 2)    # [4, H, O]  (x == h part)
    Wh = W_cell[H:, :].reshape(O, 4, O).transpose(1, 0, 2)    # [4, O, O]  (h_t part)
    bc = params["b_cell"].reshape(4, O)[:, None, :]           # [4, 1, O]

    kernel = functools.partial(gconv_lstm_decoder_kernel, H=H, O=O)

    def resident(shape):
        nd = len(shape)
        return pl.BlockSpec(shape, lambda t, _nd=nd: (0,) * _nd)

    return pl.pallas_call(
        kernel,
        out_shape=jax.ShapeDtypeStruct((seq_len, N, O), jnp.float32),
        grid=(seq_len,),
        in_specs=[resident(A.shape), resident(h.shape), resident(c.shape),
                  resident(params["W_dec"].shape), resident(params["b_dec"].shape),
                  resident(Wx.shape), resident(Wh.shape), resident(bc.shape)],
        out_specs=pl.BlockSpec((1, N, O), lambda t: (t, 0, 0)),
        scratch_shapes=[pltpu.VMEM((N, O), jnp.float32),      # h_t carry
                        pltpu.VMEM((N, O), jnp.float32),      # c_t carry
                        pltpu.VMEM((4, N, O), jnp.float32)],  # hoisted z0 per gate
        compiler_params=pltpu.CompilerParams(
            dimension_semantics=("arbitrary",),
            vmem_limit_bytes=64 * 1024 * 1024),
    )(A, h, c, params["W_dec"], params["b_dec"], Wx, Wh, bc)


def gconv_lstm_decoder_ref(h, c, edge_index, edge_attr, seq_len, params):
    """Pure-JAX reference matching the PyTorch module (for validation)."""
    N, H = h.shape
    O = params["O"]
    A = gcn_norm_dense(edge_index, edge_attr, N)
    Wd, bd = params["W_dec"], params["b_dec"]
    Wc, bc = params["W_cell"], params["b_cell"]
    s = A @ (jnp.concatenate([h, c], axis=1) @ Wd) + bd
    s = jnp.where(s > 0, s, jnp.exp(jnp.minimum(s, 0.0)) - 1.0)
    h_t, c_t = s[:, :O], s[:, O:]
    outs = []
    for _ in range(seq_len):
        z = A @ (jnp.concatenate([h, h_t], axis=1) @ Wc) + bc
        i = jax.nn.sigmoid(z[:, 0 * O:1 * O])
        f = jax.nn.sigmoid(z[:, 1 * O:2 * O])
        o = jax.nn.sigmoid(z[:, 2 * O:3 * O])
        g = jnp.tanh(z[:, 3 * O:4 * O])
        c_t = f * c_t + i * g
        h_t = o * jnp.tanh(c_t)
        outs.append(h_t)
    return jnp.stack(outs, axis=0)


def init_params(key, H, O):
    """Deterministic synthetic parameter init (shapes per module __init__)."""
    k1, k2 = jax.random.split(key)
    # decoder conv: GCNConv(2H -> 2O); stored transposed as [in, out]
    std_d = (2.0 / (2 * H + 2 * O)) ** 0.5
    W_dec = std_d * jax.random.normal(k1, (2 * H, 2 * O), jnp.float32)
    # cell conv: GCNConv(H+O -> 4O), xavier_normal_; stored transposed as [in, out]
    std_c = (2.0 / ((H + O) + 4 * O)) ** 0.5
    W_cell = std_c * jax.random.normal(k2, (H + O, 4 * O), jnp.float32)
    return dict(
        O=O,
        W_dec=W_dec,
        b_dec=jnp.zeros((1, 2 * O), jnp.float32),   # GCNConv bias is zero-init
        W_cell=W_cell,
        b_cell=jnp.zeros((1, 4 * O), jnp.float32),
    )


if __name__ == "__main__":
    key = jax.random.PRNGKey(0)
    N, H, O, T, E = 16, 8, 8, 8, 48   # nodes, hidden_channel, output_channel, seq_len, edges

    kh, kc, ks, ko, kw, kp = jax.random.split(key, 6)
    h = jax.random.normal(kh, (N, H), jnp.float32)
    c = jax.random.normal(kc, (N, H), jnp.float32)

    src = jax.random.randint(ks, (E,), 0, N)
    off = jax.random.randint(ko, (E,), 1, N)
    dst = (src + off) % N                       # guaranteed no self loops
    edge_index = jnp.stack([src, dst], axis=0)  # [2, E]
    edge_attr = jax.random.uniform(kw, (E,), jnp.float32, 0.1, 1.0)

    params = init_params(kp, H, O)

    out = gconv_lstm_decoder(h, c, edge_index, edge_attr, T, params)
    out = jax.block_until_ready(out)
    assert out.shape == (T, N, O) and out.dtype == jnp.float32
    assert bool(jnp.all(jnp.isfinite(out)))

    ref = gconv_lstm_decoder_ref(h, c, edge_index, edge_attr, T, params)
    ref = jax.block_until_ready(ref)
    assert bool(jnp.allclose(out, ref, rtol=2e-4, atol=2e-4)), \
        f"max abs diff {float(jnp.max(jnp.abs(out - ref)))}"

    print("KERNEL_OK")
</pallas_src>

<mosaic_0001>
module attributes {stable_mosaic.version = 11 : i64} {
  func.func @gconv_lstm_decoder_kernel(%arg0: i32, %arg1: memref<16x16xf32, #tpu.memory_space<vmem>>, %arg2: memref<16x8xf32, #tpu.memory_space<vmem>>, %arg3: memref<16x8xf32, #tpu.memory_space<vmem>>, %arg4: memref<16x16xf32, #tpu.memory_space<vmem>>, %arg5: memref<1x16xf32, #tpu.memory_space<vmem>>, %arg6: memref<4x8x8xf32, #tpu.memory_space<vmem>>, %arg7: memref<4x8x8xf32, #tpu.memory_space<vmem>>, %arg8: memref<4x1x8xf32, #tpu.memory_space<vmem>>, %arg9: memref<1x16x8xf32, #tpu.memory_space<vmem>>, %arg10: memref<16x8xf32, #tpu.memory_space<vmem>>, %arg11: memref<16x8xf32, #tpu.memory_space<vmem>>, %arg12: memref<4x16x8xf32, #tpu.memory_space<vmem>>) attributes {dimension_semantics = [#tpu.dimension_semantics<arbitrary>], iteration_bounds = array<i64: 8>, scalar_prefetch = 0 : i64, scratch_operands = 3 : i64, tpu.core_type = #tpu.core_type<tc>, window_params = [{pipeline_mode = #tpu.pipeline_mode<synchronous>, transform_indices = @transform_0, window_bounds = array<i64: 16, 16>}, {pipeline_mode = #tpu.pipeline_mode<synchronous>, transform_indices = @transform_1, window_bounds = array<i64: 16, 8>}, {pipeline_mode = #tpu.pipeline_mode<synchronous>, transform_indices = @transform_2, window_bounds = array<i64: 16, 8>}, {pipeline_mode = #tpu.pipeline_mode<synchronous>, transform_indices = @transform_3, window_bounds = array<i64: 16, 16>}, {pipeline_mode = #tpu.pipeline_mode<synchronous>, transform_indices = @transform_4, window_bounds = array<i64: 1, 16>}, {pipeline_mode = #tpu.pipeline_mode<synchronous>, transform_indices = @transform_5, window_bounds = array<i64: 4, 8, 8>}, {pipeline_mode = #tpu.pipeline_mode<synchronous>, transform_indices = @transform_6, window_bounds = array<i64: 4, 8, 8>}, {pipeline_mode = #tpu.pipeline_mode<synchronous>, transform_indices = @transform_7, window_bounds = array<i64: 4, 1, 8>}, {transform_indices = @transform_8, window_bounds = array<i64: 1, 16, 8>}]} {
    %c0 = arith.constant 0 : index
    %c0_0 = arith.constant 0 : index
    %0 = vector.load %arg1[%c0, %c0_0] : memref<16x16xf32, #tpu.memory_space<vmem>>, vector<16x16xf32>
    %c0_i32 = arith.constant 0 : i32
    %1 = arith.cmpi eq, %arg0, %c0_i32 : i32
    %2 = arith.extui %1 : i1 to i32
    %c0_i32_1 = arith.constant 0 : i32
    %3 = arith.cmpi ne, %2, %c0_i32_1 : i32
    scf.if %3 {
      %c0_41 = arith.constant 0 : index
      %c0_42 = arith.constant 0 : index
      %57 = vector.load %arg2[%c0_41, %c0_42] : memref<16x8xf32, #tpu.memory_space<vmem>>, vector<16x8xf32>
      %c0_43 = arith.constant 0 : index
      %c0_44 = arith.constant 0 : index
      %58 = vector.load %arg3[%c0_43, %c0_44] : memref<16x8xf32, #tpu.memory_space<vmem>>, vector<16x8xf32>
      %c0_45 = arith.constant 0 : index
      %c0_46 = arith.constant 0 : index
      %59 = vector.load %arg4[%c0_45, %c0_46] : memref<16x16xf32, #tpu.memory_space<vmem>>, vector<8x16xf32>
      %cst_47 = arith.constant dense<0.000000e+00> : vector<16x16xf32>
      %60 = tpu.matmul %57, %59, %cst_47 {dimension_numbers = #tpu.dot_dimension_numbers<[1], [0], [0], [1], [0, 0, 1, 1], [], []>} : vector<16x8xf32>, vector<8x16xf32>, vector<16x16xf32> -> vector<16x16xf32>
      %c8 = arith.constant 8 : index
      %c0_48 = arith.constant 0 : index
      %61 = vector.load %arg4[%c8, %c0_48] : memref<16x16xf32, #tpu.memory_space<vmem>>, vector<8x16xf32>
      %cst_49 = arith.constant dense<0.000000e+00> : vector<16x16xf32>
      %62 = tpu.matmul %58, %61, %cst_49 {dimension_numbers = #tpu.dot_dimension_numbers<[1], [0], [0], [1], [0, 0, 1, 1], [], []>} : vector<16x8xf32>, vector<8x16xf32>, vector<16x16xf32> -> vector<16x16xf32>
      %63 = arith.addf %60, %62 : vector<16x16xf32>
      %cst_50 = arith.constant dense<0.000000e+00> : vector<16x16xf32>
      %64 = tpu.matmul %0, %63, %cst_50 {dimension_numbers = #tpu.dot_dimension_numbers<[1], [0], [0], [1], [0, 0, 1, 1], [], []>} : vector<16x16xf32>, vector<16x16xf32>, vector<16x16xf32> -> vector<16x16xf32>
      %c0_51 = arith.constant 0 : index
      %c0_52 = arith.constant 0 : index
      %65 = vector.load %arg5[%c0_51, %c0_52] : memref<1x16xf32, #tpu.memory_space<vmem>>, vector<1x16xf32>
      %66 = vector.broadcast %65 : vector<1x16xf32> to vector<16x16xf32>
      %67 = arith.addf %64, %66 : vector<16x16xf32>
      %cst_53 = arith.constant 0.000000e+00 : f32
      %68 = vector.broadcast %cst_53 : f32 to vector<16x16xf32>
      %69 = arith.cmpf ogt, %67, %68 : vector<16x16xf32>
      %cst_54 = arith.constant 0.000000e+00 : f32
      %70 = vector.broadcast %cst_54 : f32 to vector<16x16xf32>
      %71 = arith.minimumf %67, %70 : vector<16x16xf32>
      %72 = math.exp %71 : vector<16x16xf32>
      %cst_55 = arith.constant 1.000000e+00 : f32
      %73 = vector.broadcast %cst_55 : f32 to vector<16x16xf32>
      %74 = arith.subf %72, %73 : vector<16x16xf32>
      %75 = arith.select %69, %67, %74 : vector<16x16xi1>, vector<16x16xf32>
      %76 = vector.extract_strided_slice %75 {offsets = [0, 0], sizes = [16, 8], strides = [1, 1]} : vector<16x16xf32> to vector<16x8xf32>
      %c0_56 = arith.constant 0 : index
      %c0_57 = arith.constant 0 : index
      %77 = vector.load %arg10[%c0_56, %c0_57] : memref<16x8xf32, #tpu.memory_space<vmem>>, vector<16x8xf32>
      tpu.vector_store %arg10[%c0_56, %c0_57], %76 {strides = array<i32>} : memref<16x8xf32, #tpu.memory_space<vmem>>, vector<16x8xf32>,
      %78 = vector.extract_strided_slice %75 {offsets = [0, 8], sizes = [16, 8], strides = [1, 1]} : vector<16x16xf32> to vector<16x8xf32>
      %c0_58 = arith.constant 0 : index
      %c0_59 = arith.constant 0 : index
      %79 = vector.load %arg11[%c0_58, %c0_59] : memref<16x8xf32, #tpu.memory_space<vmem>>, vector<16x8xf32>
      tpu.vector_store %arg11[%c0_58, %c0_59], %78 {strides = array<i32>} : memref<16x8xf32, #tpu.memory_space<vmem>>, vector<16x8xf32>,
      %cst_60 = arith.constant dense<0.000000e+00> : vector<16x8xf32>
      %80 = tpu.matmul %0, %57, %cst_60 {dimension_numbers = #tpu.dot_dimension_numbers<[1], [0], [0], [1], [0, 0, 1, 1], [], []>} : vector<16x16xf32>, vector<16x8xf32>, vector<16x8xf32> -> vector<16x8xf32>
      %c0_61 = arith.constant 0 : index
      %c0_62 = arith.constant 0 : index
      %c0_63 = arith.constant 0 : index
      %81 = vector.load %arg6[%c0_61, %c0_62, %c0_63] : memref<4x8x8xf32, #tpu.memory_space<vmem>>, vector<1x8x8xf32>
      %82 = vector.shape_cast %81 : vector<1x8x8xf32> to vector<8x8xf32>
      %cst_64 = arith.constant dense<0.000000e+00> : vector<16x8xf32>
      %83 = tpu.matmul %80, %82, %cst_64 {dimension_numbers = #tpu.dot_dimension_numbers<[1], [0], [0], [1], [0, 0, 1, 1], [], []>} : vector<16x8xf32>, vector<8x8xf32>, vector<16x8xf32> -> vector<16x8xf32>
      %c0_65 = arith.constant 0 : index
      %c0_66 = arith.constant 0 : index
      %c0_67 = arith.constant 0 : index
      %84 = vector.load %arg8[%c0_65, %c0_66, %c0_67] : memref<4x1x8xf32, #tpu.memory_space<vmem>>, vector<1x1x8xf32>
      %85 = vector.shape_cast %84 : vector<1x1x8xf32> to vector<1x8xf32>
      %86 = vector.broadcast %85 : vector<1x8xf32> to vector<16x8xf32>
      %87 = arith.addf %83, %86 : vector<16x8xf32>
      %c0_68 = arith.constant 0 : index
      %c0_69 = arith.constant 0 : index
      %c0_70 = arith.constant 0 : index
      %88 = vector.load %arg12[%c0_68, %c0_69, %c0_70] : memref<4x16x8xf32, #tpu.memory_space<vmem>>, vector<1x16x8xf32>
      %89 = vector.shape_cast %88 : vector<1x16x8xf32> to vector<16x8xf32>
      %90 = vector.shape_cast %87 : vector<16x8xf32> to vector<1x16x8xf32>
      tpu.vector_store %arg12[%c0_68, %c0_69, %c0_70], %90 {strides = array<i32>} : memref<4x16x8xf32, #tpu.memory_space<vmem>>, vector<1x16x8xf32>,
      %c1_71 = arith.constant 1 : index
      %c0_72 = arith.constant 0 : index
      %c0_73 = arith.constant 0 : index
      %91 = vector.load %arg6[%c1_71, %c0_72, %c0_73] : memref<4x8x8xf32, #tpu.memory_space<vmem>>, vector<1x8x8xf32>
      %92 = vector.shape_cast %91 : vector<1x8x8xf32> to vector<8x8xf32>
      %cst_74 = arith.constant dense<0.000000e+00> : vector<16x8xf32>
      %93 = tpu.matmul %80, %92, %cst_74 {dimension_numbers = #tpu.dot_dimension_numbers<[1], [0], [0], [1], [0, 0, 1, 1], [], []>} : vector<16x8xf32>, vector<8x8xf32>, vector<16x8xf32> -> vector<16x8xf32>
      %c1_75 = arith.constant 1 : index
      %c0_76 = arith.constant 0 : index
      %c0_77 = arith.constant 0 : index
      %94 = vector.load %arg8[%c1_75, %c0_76, %c0_77] : memref<4x1x8xf32, #tpu.memory_space<vmem>>, vector<1x1x8xf32>
      %95 = vector.shape_cast %94 : vector<1x1x8xf32> to vector<1x8xf32>
      %96 = vector.broadcast %95 : vector<1x8xf32> to vector<16x8xf32>
      %97 = arith.addf %93, %96 : vector<16x8xf32>
      %c1_78 = arith.constant 1 : index
      %c0_79 = arith.constant 0 : index
      %c0_80 = arith.constant 0 : index
      %98 = vector.load %arg12[%c1_78, %c0_79, %c0_80] : memref<4x16x8xf32, #tpu.memory_space<vmem>>, vector<1x16x8xf32>
      %99 = vector.shape_cast %98 : vector<1x16x8xf32> to vector<16x8xf32>
      %100 = vector.shape_cast %97 : vector<16x8xf32> to vector<1x16x8xf32>
      tpu.vector_store %arg12[%c1_78, %c0_79, %c0_80], %100 {strides = array<i32>} : memref<4x16x8xf32, #tpu.memory_space<vmem>>, vector<1x16x8xf32>,
      %c2_81 = arith.constant 2 : index
      %c0_82 = arith.constant 0 : index
      %c0_83 = arith.constant 0 : index
      %101 = vector.load %arg6[%c2_81, %c0_82, %c0_83] : memref<4x8x8xf32, #tpu.memory_space<vmem>>, vector<1x8x8xf32>
      %102 = vector.shape_cast %101 : vector<1x8x8xf32> to vector<8x8xf32>
      %cst_84 = arith.constant dense<0.000000e+00> : vector<16x8xf32>
      %103 = tpu.matmul %80, %102, %cst_84 {dimension_numbers = #tpu.dot_dimension_numbers<[1], [0], [0], [1], [0, 0, 1, 1], [], []>} : vector<16x8xf32>, vector<8x8xf32>, vector<16x8xf32> -> vector<16x8xf32>
      %c2_85 = arith.constant 2 : index
      %c0_86 = arith.constant 0 : index
      %c0_87 = arith.constant 0 : index
      %104 = vector.load %arg8[%c2_85, %c0_86, %c0_87] : memref<4x1x8xf32, #tpu.memory_space<vmem>>, vector<1x1x8xf32>
      %105 = vector.shape_cast %104 : vector<1x1x8xf32> to vector<1x8xf32>
      %106 = vector.broadcast %105 : vector<1x8xf32> to vector<16x8xf32>
      %107 = arith.addf %103, %106 : vector<16x8xf32>
      %c2_88 = arith.constant 2 : index
      %c0_89 = arith.constant 0 : index
      %c0_90 = arith.constant 0 : index
      %108 = vector.load %arg12[%c2_88, %c0_89, %c0_90] : memref<4x16x8xf32, #tpu.memory_space<vmem>>, vector<1x16x8xf32>
      %109 = vector.shape_cast %108 : vector<1x16x8xf32> to vector<16x8xf32>
      %110 = vector.shape_cast %107 : vector<16x8xf32> to vector<1x16x8xf32>
      tpu.vector_store %arg12[%c2_88, %c0_89, %c0_90], %110 {strides = array<i32>} : memref<4x16x8xf32, #tpu.memory_space<vmem>>, vector<1x16x8xf32>,
      %c3_91 = arith.constant 3 : index
      %c0_92 = arith.constant 0 : index
      %c0_93 = arith.constant 0 : index
      %111 = vector.load %arg6[%c3_91, %c0_92, %c0_93] : memref<4x8x8xf32, #tpu.memory_space<vmem>>, vector<1x8x8xf32>
      %112 = vector.shape_cast %111 : vector<1x8x8xf32> to vector<8x8xf32>
      %cst_94 = arith.constant dense<0.000000e+00> : vector<16x8xf32>
      %113 = tpu.matmul %80, %112, %cst_94 {dimension_numbers = #tpu.dot_dimension_numbers<[1], [0], [0], [1], [0, 0, 1, 1], [], []>} : vector<16x8xf32>, vector<8x8xf32>, vector<16x8xf32> -> vector<16x8xf32>
      %c3_95 = arith.constant 3 : index
      %c0_96 = arith.constant 0 : index
      %c0_97 = arith.constant 0 : index
      %114 = vector.load %arg8[%c3_95, %c0_96, %c0_97] : memref<4x1x8xf32, #tpu.memory_space<vmem>>, vector<1x1x8xf32>
      %115 = vector.shape_cast %114 : vector<1x1x8xf32> to vector<1x8xf32>
      %116 = vector.broadcast %115 : vector<1x8xf32> to vector<16x8xf32>
      %117 = arith.addf %113, %116 : vector<16x8xf32>
      %c3_98 = arith.constant 3 : index
      %c0_99 = arith.constant 0 : index
      %c0_100 = arith.constant 0 : index
      %118 = vector.load %arg12[%c3_98, %c0_99, %c0_100] : memref<4x16x8xf32, #tpu.memory_space<vmem>>, vector<1x16x8xf32>
      %119 = vector.shape_cast %118 : vector<1x16x8xf32> to vector<16x8xf32>
      %120 = vector.shape_cast %117 : vector<16x8xf32> to vector<1x16x8xf32>
      tpu.vector_store %arg12[%c3_98, %c0_99, %c0_100], %120 {strides = array<i32>} : memref<4x16x8xf32, #tpu.memory_space<vmem>>, vector<1x16x8xf32>,
    } else {
    }
    %c0_2 = arith.constant 0 : index
    %c0_3 = arith.constant 0 : index
    %4 = vector.load %arg10[%c0_2, %c0_3] : memref<16x8xf32, #tpu.memory_space<vmem>>, vector<16x8xf32>
    %c0_4 = arith.constant 0 : index
    %c0_5 = arith.constant 0 : index
    %5 = vector.load %arg11[%c0_4, %c0_5] : memref<16x8xf32, #tpu.memory_space<vmem>>, vector<16x8xf32>
    %cst = arith.constant dense<0.000000e+00> : vector<16x8xf32>
    %6 = tpu.matmul %0, %4, %cst {dimension_numbers = #tpu.dot_dimension_numbers<[1], [0], [0], [1], [0, 0, 1, 1], [], []>} : vector<16x16xf32>, vector<16x8xf32>, vector<16x8xf32> -> vector<16x8xf32>
    %c0_6 = arith.constant 0 : index
    %c0_7 = arith.constant 0 : index
    %c0_8 = arith.constant 0 : index
    %7 = vector.load %arg7[%c0_6, %c0_7, %c0_8] : memref<4x8x8xf32, #tpu.memory_space<vmem>>, vector<1x8x8xf32>
    %8 = vector.shape_cast %7 : vector<1x8x8xf32> to vector<8x8xf32>
    %cst_9 = arith.constant dense<0.000000e+00> : vector<16x8xf32>
    %9 = tpu.matmul %6, %8, %cst_9 {dimension_numbers = #tpu.dot_dimension_numbers<[1], [0], [0], [1], [0, 0, 1, 1], [], []>} : vector<16x8xf32>, vector<8x8xf32>, vector<16x8xf32> -> vector<16x8xf32>
    %c0_10 = arith.constant 0 : index
    %c0_11 = arith.constant 0 : index
    %c0_12 = arith.constant 0 : index
    %10 = vector.load %arg12[%c0_10, %c0_11, %c0_12] : memref<4x16x8xf32, #tpu.memory_space<vmem>>, vector<1x16x8xf32>
    %11 = vector.shape_cast %10 : vector<1x16x8xf32> to vector<16x8xf32>
    %12 = arith.addf %9, %11 : vector<16x8xf32>
    %13 = arith.negf %12 : vector<16x8xf32>
    %14 = math.exp %13 : vector<16x8xf32>
    %cst_13 = arith.constant 1.000000e+00 : f32
    %15 = vector.broadcast %cst_13 : f32 to vector<16x8xf32>
    %16 = arith.addf %15, %14 : vector<16x8xf32>
    %17 = arith.divf %15, %16 : vector<16x8xf32>
    %c1 = arith.constant 1 : index
    %c0_14 = arith.constant 0 : index
    %c0_15 = arith.constant 0 : index
    %18 = vector.load %arg7[%c1, %c0_14, %c0_15] : memref<4x8x8xf32, #tpu.memory_space<vmem>>, vector<1x8x8xf32>
    %19 = vector.shape_cast %18 : vector<1x8x8xf32> to vector<8x8xf32>
    %cst_16 = arith.constant dense<0.000000e+00> : vector<16x8xf32>
    %20 = tpu.matmul %6, %19, %cst_16 {dimension_numbers = #tpu.dot_dimension_numbers<[1], [0], [0], [1], [0, 0, 1, 1], [], []>} : vector<16x8xf32>, vector<8x8xf32>, vector<16x8xf32> -> vector<16x8xf32>
    %c1_17 = arith.constant 1 : index
    %c0_18 = arith.constant 0 : index
    %c0_19 = arith.constant 0 : index
    %21 = vector.load %arg12[%c1_17, %c0_18, %c0_19] : memref<4x16x8xf32, #tpu.memory_space<vmem>>, vector<1x16x8xf32>
    %22 = vector.shape_cast %21 : vector<1x16x8xf32> to vector<16x8xf32>
    %23 = arith.addf %20, %22 : vector<16x8xf32>
    %24 = arith.negf %23 : vector<16x8xf32>
    %25 = math.exp %24 : vector<16x8xf32>
    %cst_20 = arith.constant 1.000000e+00 : f32
    %26 = vector.broadcast %cst_20 : f32 to vector<16x8xf32>
    %27 = arith.addf %26, %25 : vector<16x8xf32>
    %28 = arith.divf %26, %27 : vector<16x8xf32>
    %c2 = arith.constant 2 : index
    %c0_21 = arith.constant 0 : index
    %c0_22 = arith.constant 0 : index
    %29 = vector.load %arg7[%c2, %c0_21, %c0_22] : memref<4x8x8xf32, #tpu.memory_space<vmem>>, vector<1x8x8xf32>
    %30 = vector.shape_cast %29 : vector<1x8x8xf32> to vector<8x8xf32>
    %cst_23 = arith.constant dense<0.000000e+00> : vector<16x8xf32>
    %31 = tpu.matmul %6, %30, %cst_23 {dimension_numbers = #tpu.dot_dimension_numbers<[1], [0], [0], [1], [0, 0, 1, 1], [], []>} : vector<16x8xf32>, vector<8x8xf32>, vector<16x8xf32> -> vector<16x8xf32>
    %c2_24 = arith.constant 2 : index
    %c0_25 = arith.constant 0 : index
    %c0_26 = arith.constant 0 : index
    %32 = vector.load %arg12[%c2_24, %c0_25, %c0_26] : memref<4x16x8xf32, #tpu.memory_space<vmem>>, vector<1x16x8xf32>
    %33 = vector.shape_cast %32 : vector<1x16x8xf32> to vector<16x8xf32>
    %34 = arith.addf %31, %33 : vector<16x8xf32>
    %35 = arith.negf %34 : vector<16x8xf32>
    %36 = math.exp %35 : vector<16x8xf32>
    %cst_27 = arith.constant 1.000000e+00 : f32
    %37 = vector.broadcast %cst_27 : f32 to vector<16x8xf32>
    %38 = arith.addf %37, %36 : vector<16x8xf32>
    %39 = arith.divf %37, %38 : vector<16x8xf32>
    %c3 = arith.constant 3 : index
    %c0_28 = arith.constant 0 : index
    %c0_29 = arith.constant 0 : index
    %40 = vector.load %arg7[%c3, %c0_28, %c0_29] : memref<4x8x8xf32, #tpu.memory_space<vmem>>, vector<1x8x8xf32>
    %41 = vector.shape_cast %40 : vector<1x8x8xf32> to vector<8x8xf32>
    %cst_30 = arith.constant dense<0.000000e+00> : vector<16x8xf32>
    %42 = tpu.matmul %6, %41, %cst_30 {dimension_numbers = #tpu.dot_dimension_numbers<[1], [0], [0], [1], [0, 0, 1, 1], [], []>} : vector<16x8xf32>, vector<8x8xf32>, vector<16x8xf32> -> vector<16x8xf32>
    %c3_31 = arith.constant 3 : index
    %c0_32 = arith.constant 0 : index
    %c0_33 = arith.constant 0 : index
    %43 = vector.load %arg12[%c3_31, %c0_32, %c0_33] : memref<4x16x8xf32, #tpu.memory_space<vmem>>, vector<1x16x8xf32>
    %44 = vector.shape_cast %43 : vector<1x16x8xf32> to vector<16x8xf32>
    %45 = arith.addf %42, %44 : vector<16x8xf32>
    %46 = math.tanh %45 : vector<16x8xf32>
    %47 = arith.mulf %28, %5 : vector<16x8xf32>
    %48 = arith.mulf %17, %46 : vector<16x8xf32>
    %49 = arith.addf %47, %48 : vector<16x8xf32>
    %50 = math.tanh %49 : vector<16x8xf32>
    %51 = arith.mulf %39, %50 : vector<16x8xf32>
    %c0_34 = arith.constant 0 : index
    %c0_35 = arith.constant 0 : index
    %52 = vector.load %arg11[%c0_34, %c0_35] : memref<16x8xf32, #tpu.memory_space<vmem>>, vector<16x8xf32>
    tpu.vector_store %arg11[%c0_34, %c0_35], %49 {strides = array<i32>} : memref<16x8xf32, #tpu.memory_space<vmem>>, vector<16x8xf32>,
    %c0_36 = arith.constant 0 : index
    %c0_37 = arith.constant 0 : index
    %53 = vector.load %arg10[%c0_36, %c0_37] : memref<16x8xf32, #tpu.memory_space<vmem>>, vector<16x8xf32>
    tpu.vector_store %arg10[%c0_36, %c0_37], %51 {strides = array<i32>} : memref<16x8xf32, #tpu.memory_space<vmem>>, vector<16x8xf32>,
    %c0_38 = arith.constant 0 : index
    %c0_39 = arith.constant 0 : index
    %c0_40 = arith.constant 0 : index
    %54 = vector.load %arg9[%c0_38, %c0_39, %c0_40] : memref<1x16x8xf32, #tpu.memory_space<vmem>>, vector<1x16x8xf32>
    %55 = vector.shape_cast %54 : vector<1x16x8xf32> to vector<16x8xf32>
    %56 = vector.shape_cast %51 : vector<16x8xf32> to vector<1x16x8xf32>
    tpu.vector_store %arg9[%c0_38, %c0_39, %c0_40], %56 {strides = array<i32>} : memref<1x16x8xf32, #tpu.memory_space<vmem>>, vector<1x16x8xf32>,
    return
  }
  func.func @transform_0(%arg0: i32) -> (i32, i32) {
    %c0_i32 = arith.constant 0 : i32
    %c0_i32_0 = arith.constant 0 : i32
    %c0_i32_1 = arith.constant 0 : i32
    return %c0_i32, %c0_i32_0 : i32, i32
  }
  func.func @transform_1(%arg0: i32) -> (i32, i32) {
    %c0_i32 = arith.constant 0 : i32
    %c0_i32_0 = arith.constant 0 : i32
    %c0_i32_1 = arith.constant 0 : i32
    return %c0_i32, %c0_i32_0 : i32, i32
  }
  func.func @transform_2(%arg0: i32) -> (i32, i32) {
    %c0_i32 = arith.constant 0 : i32
    %c0_i32_0 = arith.constant 0 : i32
    %c0_i32_1 = arith.constant 0 : i32
    return %c0_i32, %c0_i32_0 : i32, i32
  }
  func.func @transform_3(%arg0: i32) -> (i32, i32) {
    %c0_i32 = arith.constant 0 : i32
    %c0_i32_0 = arith.constant 0 : i32
    %c0_i32_1 = arith.constant 0 : i32
    return %c0_i32, %c0_i32_0 : i32, i32
  }
  func.func @transform_4(%arg0: i32) -> (i32, i32) {
    %c0_i32 = arith.constant 0 : i32
    %c0_i32_0 = arith.constant 0 : i32
    %c0_i32_1 = arith.constant 0 : i32
    return %c0_i32, %c0_i32_0 : i32, i32
  }
  func.func @transform_5(%arg0: i32) -> (i32, i32, i32) {
    %c0_i32 = arith.constant 0 : i32
    %c0_i32_0 = arith.constant 0 : i32
    %c0_i32_1 = arith.constant 0 : i32
    %c0_i32_2 = arith.constant 0 : i32
    return %c0_i32, %c0_i32_0, %c0_i32_1 : i32, i32, i32
  }
  func.func @transform_6(%arg0: i32) -> (i32, i32, i32) {
    %c0_i32 = arith.constant 0 : i32
    %c0_i32_0 = arith.constant 0 : i32
    %c0_i32_1 = arith.constant 0 : i32
    %c0_i32_2 = arith.constant 0 : i32
    return %c0_i32, %c0_i32_0, %c0_i32_1 : i32, i32, i32
  }
  func.func @transform_7(%arg0: i32) -> (i32, i32, i32) {
    %c0_i32 = arith.constant 0 : i32
    %c0_i32_0 = arith.constant 0 : i32
    %c0_i32_1 = arith.constant 0 : i32
    %c0_i32_2 = arith.constant 0 : i32
    return %c0_i32, %c0_i32_0, %c0_i32_1 : i32, i32, i32
  }
  func.func @transform_8(%arg0: i32) -> (i32, i32, i32) {
    %c0_i32 = arith.constant 0 : i32
    %c0_i32_0 = arith.constant 0 : i32
    %c0_i32_1 = arith.constant 0 : i32
    return %arg0, %c0_i32, %c0_i32_0 : i32, i32, i32
  }
}

</mosaic_0001>

<llo_original>
// kernel: tpu_custom_call.1
$region0: #{tpu_custom_call.1}
  #allocation0 [shape = 'u32[]', space=smem, size = 0x4, offset = 0x4, fixed_abs, tag = 'smem constant byte address 0x4 - core index']
  #allocation1 [shape = 'u32[144,128]{1,0:T(1,128)}', space=vmem, size = 0x12000, scoped, tag = 'internal scratch']
  #allocation2 [shape = 'f32[16,8]{1,0:T(8,128)}', space=vmem, size = 0x2000, scoped, tag = 'scratch operand']
  #allocation3 [shape = 'f32[16,8]{1,0:T(8,128)}', space=vmem, size = 0x2000, scoped, tag = 'scratch operand']
  #allocation4 [shape = 'f32[4,16,8]{2,1,0:T(8,128)}', space=vmem, size = 0x8000, scoped, tag = 'scratch operand']
  %s0 = inlined_call_operand.hbm [shape: f32[16,16], index: 0, kind: input, shape index: {}]
  %s1 = inlined_call_operand.hbm [shape: f32[16,8], index: 1, kind: input, shape index: {}]
  %s2 = inlined_call_operand.hbm [shape: f32[16,8], index: 2, kind: input, shape index: {}]
  %s3 = inlined_call_operand.hbm [shape: f32[16,16], index: 3, kind: input, shape index: {}]
  %s4 = inlined_call_operand.hbm [shape: f32[1,16], index: 4, kind: input, shape index: {}]
  %s5 = inlined_call_operand.hbm [shape: f32[4,8,8], index: 5, kind: input, shape index: {}]
  %s6 = inlined_call_operand.hbm [shape: f32[4,8,8], index: 6, kind: input, shape index: {}]
  %s7 = inlined_call_operand.hbm [shape: f32[4,1,8], index: 7, kind: input, shape index: {}]
  %s8 = inlined_call_operand.hbm [shape: f32[8,16,8], index: 8, kind: output, shape index: {}]
  %s9 = sld [smem:[#allocation0]]
  $region101: #{tpu_custom_call.1} parent=0
    _
  %s11 = ssub.s32 1, %s9
  %s12 = scalar_select 0, %s11, %s9
  $region1: #{tpu_custom_call.1} parent=0
    #allocation5 [shape = 'u8[8192]{0}', space=vmem, size = 0x2000, scoped, tag = 'input window, operand 0, single buffered']
    #allocation6 [shape = 's32[2]{0}', space=sflag, size = 0x8, scoped, tag = 'scoped memory for tpu_custom_call.1']
    #allocation7 [shape = 's32[2]{0}', space=sflag, size = 0x8, scoped, tag = 'scoped memory for tpu_custom_call.1']
    #allocation8 [shape = 'u8[8192]{0}', space=vmem, size = 0x2000, scoped, tag = 'input window, operand 1, single buffered']
    #allocation9 [shape = 's32[1]{0}', space=sflag, size = 0x4, scoped, tag = 'scoped memory for tpu_custom_call.1']
    #allocation10 [shape = 'u8[8192]{0}', space=vmem, size = 0x2000, scoped, tag = 'input window, operand 2, single buffered']
    #allocation11 [shape = 'u8[8192]{0}', space=vmem, size = 0x2000, scoped, tag = 'input window, operand 3, single buffered']
    #allocation12 [shape = 's32[1]{0}', space=sflag, size = 0x4, scoped, tag = 'scoped memory for tpu_custom_call.1']
    #allocation13 [shape = 'u8[512]{0}', space=vmem, size = 0x400, scoped, tag = 'input window, operand 4, single buffered']
    #allocation14 [shape = 'u8[16384]{0}', space=vmem, size = 0x4000, scoped, tag = 'input window, operand 5, single buffered']
    #allocation15 [shape = 's32[1]{0}', space=sflag, size = 0x4, scoped, tag = 'scoped memory for tpu_custom_call.1']
    #allocation16 [shape = 'u8[16384]{0}', space=vmem, size = 0x4000, scoped, tag = 'input window, operand 6, single buffered']
    #allocation17 [shape = 'u8[2048]{0}', space=vmem, size = 0x800, scoped, tag = 'input window, operand 7, single buffered']
    #allocation18 [shape = 's32[1]{0}', space=sflag, size = 0x4, scoped, tag = 'scoped memory for tpu_custom_call.1']
    #allocation19 [shape = 'u8[16384]{0}', space=vmem, size = 0x4000, scoped, tag = 'output window, operand 0']
    %13 = vsyncpa [#allocation6], 0
    %14 = vsyncpa [#allocation9], 0
    %15 = vsyncpa [#allocation12], 0
    %16 = vsyncpa [#allocation15], 0
    %17 = vsyncpa [#allocation18], 0
    %18 = vsyncpa [#allocation7], 0
    %s19 = scalar_lea.sflag [#allocation7], 1
    %20 = vsyncpa %s19, 0
    loop: start=0, step=1, limit=10
    $region2: #{tpu_custom_call.1} parent=1 // loop_pre_header
      _
    $region3: #{tpu_custom_call.1} parent=1 // loop_header
      %s22 = sphi 0, %s26
      %p23 = scmp.ge.s32.totalorder %s22, 10
      %s30 = sphi 0, %s30
      %s32 = sphi 0, %s30
      %s33 = sphi 0, %s32
      %s47 = sphi 0, %s33
      %s51 = sphi 0, %s51
      %s53 = sphi 0, %s51
      %s54 = sphi 0, %s53
      %s68 = sphi 0, %s54
      %s72 = sphi 0, %s72
      %s74 = sphi 0, %s72
      %s75 = sphi 0, %s74
      %s89 = sphi 0, %s75
      %s93 = sphi 0, %s93
      %s95 = sphi 0, %s93
      %s96 = sphi 0, %s95
      %s110 = sphi 0, %s96
      %s114 = sphi 0, %s114
      %s116 = sphi 0, %s114
      %s117 = sphi 0, %s116
      %s131 = sphi 0, %s117
      %s135 = sphi 0, %s135
      %s137 = sphi 0, %s135
      %s138 = sphi 0, %s137
      %s152 = sphi 0, %s138
      %s156 = sphi 0, %s156
      %s158 = sphi 0, %s156
      %s159 = sphi 0, %s158
      %s173 = sphi 0, %s159
      %s177 = sphi 0, %s177
      %s179 = sphi 0, %s177
      %s180 = sphi 0, %s179
      %s194 = sphi 0, %s180
      %s200 = sphi 0, %s202
      %s203 = sphi 0, %s200
      %s204 = sphi 0, %s203
      %s220 = sphi 0, %s204
    $region4: #{tpu_custom_call.1} parent=1 // loop_header_branch
      %25 = sbr.rel (%p23) target = $region8
    $region5: #{tpu_custom_call.1} parent=1 // loop_body
      %s27 = ssub.s32 %s22, 1
      %s28 = ssub.s32 %s22, 2
      %s29 = sadd.s32 %s22, 1
      %s31 = sadd.s32 %s30, 1
      %p34 = scmp.eq.s32.totalorder %s22, 7
      %p35 = scmp.ne.s32.totalorder %s30, %s32
      %p36 = scmp.eq.s32.totalorder %s22, 0
      %p37 = por %p35, %p36
      %p38 = scmp.ne.s32.totalorder %s30, %s32
      %p39 = scmp.eq.s32.totalorder %s27, 7
      %p40 = por %p38, %p39
      %p41 = scmp.ne.s32.totalorder %s32, %s33
      %p42 = scmp.eq.s32.totalorder %s27, 0
      %p43 = por %p41, %p42
      %p44 = scmp.ne.s32.totalorder %s32, %s33
      %p45 = scmp.eq.s32.totalorder %s28, 7
      %p46 = por %p44, %p45
      %p48 = scmp.ne.s32.totalorder %s33, %s47
      %p49 = scmp.eq.s32.totalorder %s28, 0
      %p50 = por %p48, %p49
      %s52 = sadd.s32 %s51, 1
      %p55 = scmp.eq.s32.totalorder %s22, 7
      %p56 = scmp.ne.s32.totalorder %s51, %s53
      %p57 = scmp.eq.s32.totalorder %s22, 0
      %p58 = por %p56, %p57
      %p59 = scmp.ne.s32.totalorder %s51, %s53
      %p60 = scmp.eq.s32.totalorder %s27, 7
      %p61 = por %p59, %p60
      %p62 = scmp.ne.s32.totalorder %s53, %s54
      %p63 = scmp.eq.s32.totalorder %s27, 0
      %p64 = por %p62, %p63
      %p65 = scmp.ne.s32.totalorder %s53, %s54
      %p66 = scmp.eq.s32.totalorder %s28, 7
      %p67 = por %p65, %p66
      %p69 = scmp.ne.s32.totalorder %s54, %s68
      %p70 = scmp.eq.s32.totalorder %s28, 0
      %p71 = por %p69, %p70
      %s73 = sadd.s32 %s72, 1
      %p76 = scmp.eq.s32.totalorder %s22, 7
      %p77 = scmp.ne.s32.totalorder %s72, %s74
      %p78 = scmp.eq.s32.totalorder %s22, 0
      %p79 = por %p77, %p78
      %p80 = scmp.ne.s32.totalorder %s72, %s74
      %p81 = scmp.eq.s32.totalorder %s27, 7
      %p82 = por %p80, %p81
      %p83 = scmp.ne.s32.totalorder %s74, %s75
      %p84 = scmp.eq.s32.totalorder %s27, 0
      %p85 = por %p83, %p84
      %p86 = scmp.ne.s32.totalorder %s74, %s75
      %p87 = scmp.eq.s32.totalorder %s28, 7
      %p88 = por %p86, %p87
      %p90 = scmp.ne.s32.totalorder %s75, %s89
      %p91 = scmp.eq.s32.totalorder %s28, 0
      %p92 = por %p90, %p91
      %s94 = sadd.s32 %s93, 1
      %p97 = scmp.eq.s32.totalorder %s22, 7
      %p98 = scmp.ne.s32.totalorder %s93, %s95
      %p99 = scmp.eq.s32.totalorder %s22, 0
      %p100 = por %p98, %p99
      %p101 = scmp.ne.s32.totalorder %s93, %s95
      %p102 = scmp.eq.s32.totalorder %s27, 7
      %p103 = por %p101, %p102
      %p104 = scmp.ne.s32.totalorder %s95, %s96
      %p105 = scmp.eq.s32.totalorder %s27, 0
      %p106 = por %p104, %p105
      %p107 = scmp.ne.s32.totalorder %s95, %s96
      %p108 = scmp.eq.s32.totalorder %s28, 7
      %p109 = por %p107, %p108
      %p111 = scmp.ne.s32.totalorder %s96, %s110
      %p112 = scmp.eq.s32.totalorder %s28, 0
      %p113 = por %p111, %p112
      %s115 = sadd.s32 %s114, 1
      %p118 = scmp.eq.s32.totalorder %s22, 7
      %p119 = scmp.ne.s32.totalorder %s114, %s116
      %p120 = scmp.eq.s32.totalorder %s22, 0
      %p121 = por %p119, %p120
      %p122 = scmp.ne.s32.totalorder %s114, %s116
      %p123 = scmp.eq.s32.totalorder %s27, 7
      %p124 = por %p122, %p123
      %p125 = scmp.ne.s32.totalorder %s116, %s117
      %p126 = scmp.eq.s32.totalorder %s27, 0
      %p127 = por %p125, %p126
      %p128 = scmp.ne.s32.totalorder %s116, %s117
      %p129 = scmp.eq.s32.totalorder %s28, 7
      %p130 = por %p128, %p129
      %p132 = scmp.ne.s32.totalorder %s117, %s131
      %p133 = scmp.eq.s32.totalorder %s28, 0
      %p134 = por %p132, %p133
      %s136 = sadd.s32 %s135, 1
      %p139 = scmp.eq.s32.totalorder %s22, 7
      %p140 = scmp.ne.s32.totalorder %s135, %s137
      %p141 = scmp.eq.s32.totalorder %s22, 0
      %p142 = por %p140, %p141
      %p143 = scmp.ne.s32.totalorder %s135, %s137
      %p144 = scmp.eq.s32.totalorder %s27, 7
      %p145 = por %p143, %p144
      %p146 = scmp.ne.s32.totalorder %s137, %s138
      %p147 = scmp.eq.s32.totalorder %s27, 0
      %p148 = por %p146, %p147
      %p149 = scmp.ne.s32.totalorder %s137, %s138
      %p150 = scmp.eq.s32.totalorder %s28, 7
      %p151 = por %p149, %p150
      %p153 = scmp.ne.s32.totalorder %s138, %s152
      %p154 = scmp.eq.s32.totalorder %s28, 0
      %p155 = por %p153, %p154
      %s157 = sadd.s32 %s156, 1
      %p160 = scmp.eq.s32.totalorder %s22, 7
      %p161 = scmp.ne.s32.totalorder %s156, %s158
      %p162 = scmp.eq.s32.totalorder %s22, 0
      %p163 = por %p161, %p162
      %p164 = scmp.ne.s32.totalorder %s156, %s158
      %p165 = scmp.eq.s32.totalorder %s27, 7
      %p166 = por %p164, %p165
      %p167 = scmp.ne.s32.totalorder %s158, %s159
      %p168 = scmp.eq.s32.totalorder %s27, 0
      %p169 = por %p167, %p168
      %p170 = scmp.ne.s32.totalorder %s158, %s159
      %p171 = scmp.eq.s32.totalorder %s28, 7
      %p172 = por %p170, %p171
      %p174 = scmp.ne.s32.totalorder %s159, %s173
      %p175 = scmp.eq.s32.totalorder %s28, 0
      %p176 = por %p174, %p175
      %s178 = sadd.s32 %s177, 1
      %p181 = scmp.eq.s32.totalorder %s22, 7
      %p182 = scmp.ne.s32.totalorder %s177, %s179
      %p183 = scmp.eq.s32.totalorder %s22, 0
      %p184 = por %p182, %p183
      %p185 = scmp.ne.s32.totalorder %s177, %s179
      %p186 = scmp.eq.s32.totalorder %s27, 7
      %p187 = por %p185, %p186
      %p188 = scmp.ne.s32.totalorder %s179, %s180
      %p189 = scmp.eq.s32.totalorder %s27, 0
      %p190 = por %p188, %p189
      %p191 = scmp.ne.s32.totalorder %s179, %s180
      %p192 = scmp.eq.s32.totalorder %s28, 7
      %p193 = por %p191, %p192
      %p195 = scmp.ne.s32.totalorder %s180, %s194
      %p196 = scmp.eq.s32.totalorder %s28, 0
      %p197 = por %p195, %p196
      %s198 = ssub.s32 %s22, %s29
      %p199 = scmp.eq.s32.totalorder %s198, 0
      %s201 = sadd.s32 %s200, 1
      %s202 = scalar_select %p199, %s200, %s201
      %p205 = pneg %p199
      %p206 = scmp.eq.s32.totalorder %s22, 7
      %p207 = por %p205, %p206
      %p208 = scmp.ne.s32.totalorder %s200, %s203
      %p209 = scmp.eq.s32.totalorder %s22, 0
      %p210 = por %p208, %p209
      %p211 = scmp.ne.s32.totalorder %s200, %s203
      %p212 = scmp.eq.s32.totalorder %s27, 7
      %p213 = por %p211, %p212
      %p214 = scmp.ne.s32.totalorder %s203, %s204
      %p215 = scmp.eq.s32.totalorder %s27, 0
      %p216 = por %p214, %p215
      %p217 = scmp.ne.s32.totalorder %s203, %s204
      %p218 = scmp.eq.s32.totalorder %s28, 7
      %p219 = por %p217, %p218
      %p221 = scmp.ne.s32.totalorder %s204, %s220
      %p222 = scmp.eq.s32.totalorder %s28, 0
      %p223 = por %p221, %p222
      %p224 = scmp.le.s32.totalorder 1, %s22
      %p225 = scmp.lt.s32.totalorder %s22, 9
      %p226 = pnand %p224, %p225
      %p227 = pneg %p226
      // Predicated region
      $region9: #{tpu_custom_call.1} parent=5 // pred_check
        _
      $region10: #{tpu_custom_call.1} parent=5 // pred_check_branch
        %229 = sbr.rel (%p226) target = $region12
      $region11: #{tpu_custom_call.1} parent=5 // pred_region
        %s230 = ssub.s32 %s22, 1
        // Predicated region
        $region13: #{tpu_custom_call.1} parent=11 // pred_check
          %p231 = pneg %p43
        $region14: #{tpu_custom_call.1} parent=11 // pred_check_branch
          %233 = sbr.rel (%p231) target = $region16
        $region15: #{tpu_custom_call.1} parent=11 // pred_region
          %s235 = ssub.s32 256, 256
          %236 = vsyncadd [#allocation6], %s235
          %s237 = sshll.u32 [#allocation5], 4
          %s238 = int_to_ptr.vmem [resolvable:$true] %s237
          %243 = dma.hbm_to_vmem [thread:$0]  %s0, 256, %s238, [#allocation6], 128, 128, 8
        $region16: #{tpu_custom_call.1} parent=11 // pred_fallthru
          _
        // Predicated region
        $region17: #{tpu_custom_call.1} parent=11 // pred_check
          %p244 = pneg %p64
        $region18: #{tpu_custom_call.1} parent=11 // pred_check_branch
          %246 = sbr.rel (%p244) target = $region20
        $region19: #{tpu_custom_call.1} parent=11 // pred_region
          %s248 = ssub.s32 256, 256
          %249 = vsyncadd [#allocation9], %s248
          %s250 = sshll.u32 [#allocation8], 4
          %s251 = int_to_ptr.vmem [resolvable:$true] %s250
          %256 = dma.hbm_to_vmem [thread:$0]  %s1, 256, %s251, [#allocation9], 128, 128, 8
        $region20: #{tpu_custom_call.1} parent=11 // pred_fallthru
          _
        // Predicated region
        $region21: #{tpu_custom_call.1} parent=11 // pred_check
          %p257 = pneg %p85
        $region22: #{tpu_custom_call.1} parent=11 // pred_check_branch
          %259 = sbr.rel (%p257) target = $region24
        $region23: #{tpu_custom_call.1} parent=11 // pred_region
          %s261 = ssub.s32 256, 256
          %262 = vsyncadd [#allocation9], %s261
          %s263 = sshll.u32 [#allocation10], 4
          %s264 = int_to_ptr.vmem [resolvable:$true] %s263
          %269 = dma.hbm_to_vmem [thread:$0]  %s2, 256, %s264, [#allocation9], 128, 128, 8
        $region24: #{tpu_custom_call.1} parent=11 // pred_fallthru
          _
        // Predicated region
        $region25: #{tpu_custom_call.1} parent=11 // pred_check
          %p270 = pneg %p106
        $region26: #{tpu_custom_call.1} parent=11 // pred_check_branch
          %272 = sbr.rel (%p270) target = $region28
        $region27: #{tpu_custom_call.1} parent=11 // pred_region
          %s274 = ssub.s32 256, 256
          %275 = vsyncadd [#allocation12], %s274
          %s276 = sshll.u32 [#allocation11], 4
          %s277 = int_to_ptr.vmem [resolvable:$true] %s276
          %282 = dma.hbm_to_vmem [thread:$0]  %s3, 256, %s277, [#allocation12], 128, 128, 8
        $region28: #{tpu_custom_call.1} parent=11 // pred_fallthru
          _
        // Predicated region
        $region29: #{tpu_custom_call.1} parent=11 // pred_check
          %p283 = pneg %p127
        $region30: #{tpu_custom_call.1} parent=11 // pred_check_branch
          %285 = sbr.rel (%p283) target = $region32
        $region31: #{tpu_custom_call.1} parent=11 // pred_region
          %s287 = ssub.s32 16, 16
          %288 = vsyncadd [#allocation12], %s287
          %s290 = sshll.u32 [#allocation13], 4
          %s291 = int_to_ptr.vmem [resolvable:$true] %s290
          %293 = dma.hbm_to_vmem [thread:$0]  %s4, 16, %s291, [#allocation12]
        $region32: #{tpu_custom_call.1} parent=11 // pred_fallthru
          _
        // Predicated region
        $region33: #{tpu_custom_call.1} parent=11 // pred_check
          %p294 = pneg %p148
        $region34: #{tpu_custom_call.1} parent=11 // pred_check_branch
          %296 = sbr.rel (%p294) target = $region36
        $region35: #{tpu_custom_call.1} parent=11 // pred_region
          %s298 = ssub.s32 512, 512
          %299 = vsyncadd [#allocation15], %s298
          %s300 = sshll.u32 [#allocation14], 4
          %s301 = int_to_ptr.vmem [resolvable:$true] %s300
          %306 = dma.hbm_to_vmem [thread:$0]  %s5, 512, %s301, [#allocation15], 128, 128, 8
        $region36: #{tpu_custom_call.1} parent=11 // pred_fallthru
          _
        // Predicated region
        $region37: #{tpu_custom_call.1} parent=11 // pred_check
          %p307 = pneg %p169
        $region38: #{tpu_custom_call.1} parent=11 // pred_check_branch
          %309 = sbr.rel (%p307) target = $region40
        $region39: #{tpu_custom_call.1} parent=11 // pred_region
          %s311 = ssub.s32 512, 512
          %312 = vsyncadd [#allocation15], %s311
          %s313 = sshll.u32 [#allocation16], 4
          %s314 = int_to_ptr.vmem [resolvable:$true] %s313
          %319 = dma.hbm_to_vmem [thread:$0]  %s6, 512, %s314, [#allocation15], 128, 128, 8
        $region40: #{tpu_custom_call.1} parent=11 // pred_fallthru
          _
        // Predicated region
        $region41: #{tpu_custom_call.1} parent=11 // pred_check
          %p320 = pneg %p190
        $region42: #{tpu_custom_call.1} parent=11 // pred_check_branch
          %322 = sbr.rel (%p320) target = $region44
        $region43: #{tpu_custom_call.1} parent=11 // pred_region
          %s324 = ssub.s32 64, 64
          %325 = vsyncadd [#allocation18], %s324
          %s326 = sshll.u32 [#allocation17], 4
          %s327 = int_to_ptr.vmem [resolvable:$true] %s326
          %332 = dma.hbm_to_vmem [thread:$0]  %s7, 64, %s327, [#allocation18], 16, 16, 1
        $region44: #{tpu_custom_call.1} parent=11 // pred_fallthru
          _
      $region12: #{tpu_custom_call.1} parent=5 // pred_fallthru
        _
      %p333 = scmp.lt.s32.totalorder %s22, 8
      // Predicated region
      $region45: #{tpu_custom_call.1} parent=5 // pred_check
        %p334 = pneg %p333
      $region46: #{tpu_custom_call.1} parent=5 // pred_check_branch
        %336 = sbr.rel (%p334) target = $region48
      $region47: #{tpu_custom_call.1} parent=5 // pred_region
        _
      $region48: #{tpu_custom_call.1} parent=5 // pred_fallthru
        _
      %p337 = scmp.le.s32.totalorder 1, %s22
      %p338 = scmp.lt.s32.totalorder %s22, 9
      %p339 = pnand %p337, %p338
      %p340 = pneg %p339
      // Predicated region
      $region49: #{tpu_custom_call.1} parent=5 // pred_check
        _
      $region50: #{tpu_custom_call.1} parent=5 // pred_check_branch
        %342 = sbr.rel (%p339) target = $region52
      $region51: #{tpu_custom_call.1} parent=5 // pred_region
        %s343 = ssub.s32 %s22, 1
        // Predicated region
        $region53: #{tpu_custom_call.1} parent=51 // pred_check
          %p344 = pneg %p43
        $region54: #{tpu_custom_call.1} parent=51 // pred_check_branch
          %346 = sbr.rel (%p344) target = $region56
        $region55: #{tpu_custom_call.1} parent=51 // pred_region
          %347 = dma.done [#allocation6], 256
        $region56: #{tpu_custom_call.1} parent=51 // pred_fallthru
          _
        // Predicated region
        $region57: #{tpu_custom_call.1} parent=51 // pred_check
          %p348 = pneg %p64
        $region58: #{tpu_custom_call.1} parent=51 // pred_check_branch
          %350 = sbr.rel (%p348) target = $region60
        $region59: #{tpu_custom_call.1} parent=51 // pred_region
          %351 = dma.done [#allocation9], 256
        $region60: #{tpu_custom_call.1} parent=51 // pred_fallthru
          _
        // Predicated region
        $region61: #{tpu_custom_call.1} parent=51 // pred_check
          %p352 = pneg %p85
        $region62: #{tpu_custom_call.1} parent=51 // pred_check_branch
          %354 = sbr.rel (%p352) target = $region64
        $region63: #{tpu_custom_call.1} parent=51 // pred_region
          %355 = dma.done [#allocation9], 256
        $region64: #{tpu_custom_call.1} parent=51 // pred_fallthru
          _
        // Predicated region
        $region65: #{tpu_custom_call.1} parent=51 // pred_check
          %p356 = pneg %p106
        $region66: #{tpu_custom_call.1} parent=51 // pred_check_branch
          %358 = sbr.rel (%p356) target = $region68
        $region67: #{tpu_custom_call.1} parent=51 // pred_region
          %359 = dma.done [#allocation12], 256
        $region68: #{tpu_custom_call.1} parent=51 // pred_fallthru
          _
        // Predicated region
        $region69: #{tpu_custom_call.1} parent=51 // pred_check
          %p360 = pneg %p127
        $region70: #{tpu_custom_call.1} parent=51 // pred_check_branch
          %362 = sbr.rel (%p360) target = $region72
        $region71: #{tpu_custom_call.1} parent=51 // pred_region
          %363 = dma.done [#allocation12], 16
        $region72: #{tpu_custom_call.1} parent=51 // pred_fallthru
          _
        // Predicated region
        $region73: #{tpu_custom_call.1} parent=51 // pred_check
          %p364 = pneg %p148
        $region74: #{tpu_custom_call.1} parent=51 // pred_check_branch
          %366 = sbr.rel (%p364) target = $region76
        $region75: #{tpu_custom_call.1} parent=51 // pred_region
          %367 = dma.done [#allocation15], 512
        $region76: #{tpu_custom_call.1} parent=51 // pred_fallthru
          _
        // Predicated region
        $region77: #{tpu_custom_call.1} parent=51 // pred_check
          %p368 = pneg %p169
        $region78: #{tpu_custom_call.1} parent=51 // pred_check_branch
          %370 = sbr.rel (%p368) target = $region80
        $region79: #{tpu_custom_call.1} parent=51 // pred_region
          %371 = dma.done [#allocation15], 512
        $region80: #{tpu_custom_call.1} parent=51 // pred_fallthru
          _
        // Predicated region
        $region81: #{tpu_custom_call.1} parent=51 // pred_check
          %p372 = pneg %p190
        $region82: #{tpu_custom_call.1} parent=51 // pred_check_branch
          %374 = sbr.rel (%p372) target = $region84
        $region83: #{tpu_custom_call.1} parent=51 // pred_region
          %375 = dma.done [#allocation18], 64
        $region84: #{tpu_custom_call.1} parent=51 // pred_fallthru
          _
        %p376 = pneg %p43
        %p377 = pneg %p40
        %p378 = pneg %p64
        %p379 = pneg %p61
        %p380 = pneg %p85
        %p381 = pneg %p82
        %p382 = pneg %p106
        %p383 = pneg %p103
        %p384 = pneg %p127
        %p385 = pneg %p124
        %p386 = pneg %p148
        %p387 = pneg %p145
        %p388 = pneg %p169
        %p389 = pneg %p166
        %p390 = pneg %p190
        %p391 = pneg %p187
        %p392 = pneg %p216
        %p393 = pneg %p213
        %s394 = sand.u32 %s203, 1
        %s395 = scalar_lea.sflag [#allocation7], %s394
        %s396 = sand.u32 %s203, 1
        %s397 = smul.addr %s396, 16
        %s398 = scalar_lea.vmem [#allocation19], %s397
        %v399 = vld [vmem:[#allocation5] sm:$0xff]
        %v400 = vld [vmem:[#allocation5 + $0x8] sm:$0xff]
        %p401 = scmp.eq.s32.totalorder %s27, 0
        // Predicated region
        $region85: #{tpu_custom_call.1} parent=51 // pred_check
          %p402 = pneg %p401
        $region86: #{tpu_custom_call.1} parent=51 // pred_check_branch
          %404 = sbr.rel (%p402) target = $region88
        $region87: #{tpu_custom_call.1} parent=51 // pred_region
          %v405 = vld [vmem:[#allocation8] sm:$0xff]
          %v406 = vld [vmem:[#allocation8 + $0x8] sm:$0xff]
          %v407 = vld [vmem:[#allocation10] sm:$0xff]
          %v408 = vld [vmem:[#allocation10 + $0x8] sm:$0xff]
          %v409 = vld [vmem:[#allocation11] sm:$0xff]
          %v410 = vld [vmem:[#allocation11 + $0x8] sm:$0xff]
          %vm411 = vcmask 64512
          %v413 = vsel %vm411, %v407, 0
          %v416 = vsel %vm411, %v408, 0
          %418 = vmatprep.subr.mxu0 0.0
          %419 = vmatpush1.msra.mxu0 %v410
          %420 = vmatprep.subr.mxu0 0.0
          %421 = vmatpush1.msra.mxu0 0.0
          %422 = vmatprep.subr.mxu0 0.0
          %423 = vmatpush1.msra.mxu0 0.0
          %424 = vmatprep.subr.mxu0 0.0
          %425 = vmatpush1.msra.mxu0 0.0
          %426 = vmatprep.subr.mxu0 0.0
          %427 = vmatpush1.msra.mxu0 0.0
          %428 = vmatprep.subr.mxu0 0.0
          %429 = vmatpush1.msra.mxu0 0.0
          %430 = vmatprep.subr.mxu0 0.0
          %431 = vmatpush1.msra.mxu0 0.0
          %432 = vmatprep.subr.mxu0 0.0
          %433 = vmatpush1.msra.mxu0 0.0
          %434 = vmatprep.subr.mxu0 0.0
          %435 = vmatpush1.msra.mxu0 0.0
          %436 = vmatprep.subr.mxu0 0.0
          %437 = vmatpush1.msra.mxu0 0.0
          %438 = vmatprep.subr.mxu0 0.0
          %439 = vmatpush1.msra.mxu0 0.0
          %440 = vmatprep.subr.mxu0 0.0
          %441 = vmatpush1.msra.mxu0 0.0
          %442 = vmatprep.subr.mxu0 0.0
          %443 = vmatpush1.msra.mxu0 0.0
          %444 = vmatprep.subr.mxu0 0.0
          %445 = vmatpush1.msra.mxu0 0.0
          %446 = vmatprep.subr.mxu0 0.0
          %447 = vmatpush1.msra.mxu0 0.0
          %448 = vmatprep.subr.mxu0 0.0
          %449 = vmatpush1.msra.mxu0 0.0
          %450 = vmatprep.subr.mxu0 0.0
          %451 = vmatpush1.msra.mxu0 0.0
          %452 = vmatprep.subr.mxu0 0.0
          %453 = vmatpush1.msra.mxu0 0.0
          %454 = vmatprep.subr.mxu0 0.0
          %455 = vmatpush1.msra.mxu0 0.0
          %456 = vmatprep.subr.mxu0 0.0
          %457 = vmatpush1.msra.mxu0 0.0
          %458 = vmatprep.subr.mxu0 0.0
          %459 = vmatpush1.msra.mxu0 0.0
          %460 = vmatprep.subr.mxu0 0.0
          %461 = vmatpush1.msra.mxu0 0.0
          %462 = vmatprep.subr.mxu0 0.0
          %463 = vmatpush1.msra.mxu0 0.0
          %464 = vmatprep.subr.mxu0 0.0
          %465 = vmatpush1.msra.mxu0 0.0
          %466 = vmatprep.subr.mxu0 0.0
          %467 = vmatpush1.msra.mxu0 0.0
          %468 = vmatprep.subr.mxu0 0.0
          %469 = vmatpush1.msra.mxu0 0.0
          %470 = vmatprep.subr.mxu0 0.0
          %471 = vmatpush1.msra.mxu0 0.0
          %472 = vmatprep.subr.mxu0 0.0
          %473 = vmatpush1.msra.mxu0 0.0
          %474 = vmatprep.subr.mxu0 0.0
          %475 = vmatpush1.msra.mxu0 0.0
          %476 = vmatprep.subr.mxu0 0.0
          %477 = vmatpush1.msra.mxu0 0.0
          %478 = vmatprep.subr.mxu0 0.0
          %479 = vmatpush1.msra.mxu0 0.0
          %480 = vmatprep.subr.mxu0 0.0
          %481 = vmatpush1.msra.mxu0 0.0
          %482 = vmatprep.mubr.f32.mxu0 0.0
          %483 = vmatmul.mubr.f32.gmra.mrb[0].mxu0 %v413
          %v484 = vpop.f32.mrb[0].mxu0
          %v485 = vadd.f32 0.0, %v484
          %v486 = vpop.f32.mrb[0].mxu0
          %487 = vmatprep.mubr.f32.mxu0 0.0
          %488 = vmatmul.mubr.f32.gmra.mrb[0].mxu0 %v416
          %v489 = vpop.f32.mrb[0].mxu0
          %v490 = vadd.f32 0.0, %v489
          %v491 = vpop.f32.mrb[0].mxu0
          %492 = vdwg.mxu0
          %v494 = vsel %vm411, %v405, 0
          %v497 = vsel %vm411, %v406, 0
          %499 = vmatprep.subr.mxu0 0.0
          %500 = vmatpush1.msra.mxu0 %v409
          %501 = vmatprep.subr.mxu0 0.0
          %502 = vmatpush1.msra.mxu0 0.0
          %503 = vmatprep.subr.mxu0 0.0
          %504 = vmatpush1.msra.mxu0 0.0
          %505 = vmatprep.subr.mxu0 0.0
          %506 = vmatpush1.msra.mxu0 0.0
          %507 = vmatprep.subr.mxu0 0.0
          %508 = vmatpush1.msra.mxu0 0.0
          %509 = vmatprep.subr.mxu0 0.0
          %510 = vmatpush1.msra.mxu0 0.0
          %511 = vmatprep.subr.mxu0 0.0
          %512 = vmatpush1.msra.mxu0 0.0
          %513 = vmatprep.subr.mxu0 0.0
          %514 = vmatpush1.msra.mxu0 0.0
          %515 = vmatprep.subr.mxu0 0.0
          %516 = vmatpush1.msra.mxu0 0.0
          %517 = vmatprep.subr.mxu0 0.0
          %518 = vmatpush1.msra.mxu0 0.0
          %519 = vmatprep.subr.mxu0 0.0
          %520 = vmatpush1.msra.mxu0 0.0
          %521 = vmatprep.subr.mxu0 0.0
          %522 = vmatpush1.msra.mxu0 0.0
          %523 = vmatprep.subr.mxu0 0.0
          %524 = vmatpush1.msra.mxu0 0.0
          %525 = vmatprep.subr.mxu0 0.0
          %526 = vmatpush1.msra.mxu0 0.0
          %527 = vmatprep.subr.mxu0 0.0
          %528 = vmatpush1.msra.mxu0 0.0
          %529 = vmatprep.subr.mxu0 0.0
          %530 = vmatpush1.msra.mxu0 0.0
          %531 = vmatprep.subr.mxu0 0.0
          %532 = vmatpush1.msra.mxu0 0.0
          %533 = vmatprep.subr.mxu0 0.0
          %534 = vmatpush1.msra.mxu0 0.0
          %535 = vmatprep.subr.mxu0 0.0
          %536 = vmatpush1.msra.mxu0 0.0
          %537 = vmatprep.subr.mxu0 0.0
          %538 = vmatpush1.msra.mxu0 0.0
          %539 = vmatprep.subr.mxu0 0.0
          %540 = vmatpush1.msra.mxu0 0.0
          %541 = vmatprep.subr.mxu0 0.0
          %542 = vmatpush1.msra.mxu0 0.0
          %543 = vmatprep.subr.mxu0 0.0
          %544 = vmatpush1.msra.mxu0 0.0
          %545 = vmatprep.subr.mxu0 0.0
          %546 = vmatpush1.msra.mxu0 0.0
          %547 = vmatprep.subr.mxu0 0.0
          %548 = vmatpush1.msra.mxu0 0.0
          %549 = vmatprep.subr.mxu0 0.0
          %550 = vmatpush1.msra.mxu0 0.0
          %551 = vmatprep.subr.mxu0 0.0
          %552 = vmatpush1.msra.mxu0 0.0
          %553 = vmatprep.subr.mxu0 0.0
          %554 = vmatpush1.msra.mxu0 0.0
          %555 = vmatprep.subr.mxu0 0.0
          %556 = vmatpush1.msra.mxu0 0.0
          %557 = vmatprep.subr.mxu0 0.0
          %558 = vmatpush1.msra.mxu0 0.0
          %559 = vmatprep.subr.mxu0 0.0
          %560 = vmatpush1.msra.mxu0 0.0
          %561 = vmatprep.subr.mxu0 0.0
          %562 = vmatpush1.msra.mxu0 0.0
          %563 = vmatprep.mubr.f32.mxu0 0.0
          %564 = vmatmul.mubr.f32.gmra.mrb[0].mxu0 %v494
          %v565 = vpop.f32.mrb[0].mxu0
          %v566 = vadd.f32 %v485, %v565
          %v567 = vpop.f32.mrb[0].mxu0
          %568 = vmatprep.mubr.f32.mxu0 0.0
          %569 = vmatmul.mubr.f32.gmra.mrb[0].mxu0 %v497
          %v570 = vpop.f32.mrb[0].mxu0
          %v571 = vadd.f32 %v490, %v570
          %v572 = vpop.f32.mrb[0].mxu0
          %573 = vdwg.mxu0
          %v574 = vld [vmem:[#allocation13] sm:$0x1]
          %v576 = vlaneseq
          %v577 = vshrl.u32 %v576, 7
          %v578 = vsub.s32 0, %v577
          %v579 = vrot.slane %v574, %v578
          %vm581 = vcmask 130048
          %v583 = vsel %vm581, %v399, 0
          %v586 = vsel %vm581, %v400, 0
          %588 = vmatprep.subr.mxu0 0.0
          %589 = vmatpush1.msra.mxu0 %v566
          %590 = vmatprep.subr.mxu0 0.0
          %591 = vmatpush1.msra.mxu0 %v571
          %592 = vmatprep.subr.mxu0 0.0
          %593 = vmatpush1.msra.mxu0 0.0
          %594 = vmatprep.subr.mxu0 0.0
          %595 = vmatpush1.msra.mxu0 0.0
          %596 = vmatprep.subr.mxu0 0.0
          %597 = vmatpush1.msra.mxu0 0.0
          %598 = vmatprep.subr.mxu0 0.0
          %599 = vmatpush1.msra.mxu0 0.0
          %600 = vmatprep.subr.mxu0 0.0
          %601 = vmatpush1.msra.mxu0 0.0
          %602 = vmatprep.subr.mxu0 0.0
          %603 = vmatpush1.msra.mxu0 0.0
          %604 = vmatprep.subr.mxu0 0.0
          %605 = vmatpush1.msra.mxu0 0.0
          %606 = vmatprep.subr.mxu0 0.0
          %607 = vmatpush1.msra.mxu0 0.0
          %608 = vmatprep.subr.mxu0 0.0
          %609 = vmatpush1.msra.mxu0 0.0
          %610 = vmatprep.subr.mxu0 0.0
          %611 = vmatpush1.msra.mxu0 0.0
          %612 = vmatprep.subr.mxu0 0.0
          %613 = vmatpush1.msra.mxu0 0.0
          %614 = vmatprep.subr.mxu0 0.0
          %615 = vmatpush1.msra.mxu0 0.0
          %616 = vmatprep.subr.mxu0 0.0
          %617 = vmatpush1.msra.mxu0 0.0
          %618 = vmatprep.subr.mxu0 0.0
          %619 = vmatpush1.msra.mxu0 0.0
          %620 = vmatprep.subr.mxu0 0.0
          %621 = vmatpush1.msra.mxu0 0.0
          %622 = vmatprep.subr.mxu0 0.0
          %623 = vmatpush1.msra.mxu0 0.0
          %624 = vmatprep.subr.mxu0 0.0
          %625 = vmatpush1.msra.mxu0 0.0
          %626 = vmatprep.subr.mxu0 0.0
          %627 = vmatpush1.msra.mxu0 0.0
          %628 = vmatprep.subr.mxu0 0.0
          %629 = vmatpush1.msra.mxu0 0.0
          %630 = vmatprep.subr.mxu0 0.0
          %631 = vmatpush1.msra.mxu0 0.0
          %632 = vmatprep.subr.mxu0 0.0
          %633 = vmatpush1.msra.mxu0 0.0
          %634 = vmatprep.subr.mxu0 0.0
          %635 = vmatpush1.msra.mxu0 0.0
          %636 = vmatprep.subr.mxu0 0.0
          %637 = vmatpush1.msra.mxu0 0.0
          %638 = vmatprep.subr.mxu0 0.0
          %639 = vmatpush1.msra.mxu0 0.0
          %640 = vmatprep.subr.mxu0 0.0
          %641 = vmatpush1.msra.mxu0 0.0
          %642 = vmatprep.subr.mxu0 0.0
          %643 = vmatpush1.msra.mxu0 0.0
          %644 = vmatprep.subr.mxu0 0.0
          %645 = vmatpush1.msra.mxu0 0.0
          %646 = vmatprep.subr.mxu0 0.0
          %647 = vmatpush1.msra.mxu0 0.0
          %648 = vmatprep.subr.mxu0 0.0
          %649 = vmatpush1.msra.mxu0 0.0
          %650 = vmatprep.subr.mxu0 0.0
          %651 = vmatpush1.msra.mxu0 0.0
          %652 = vmatprep.mubr.f32.mxu0 0.0
          %653 = vmatmul.mubr.f32.gmra.mrb[0].mxu0 %v583
          %v654 = vpop.f32.mrb[0].mxu0
          %v655 = vadd.f32 %v579, %v654
          %v656 = vpop.f32.mrb[0].mxu0
          %657 = vmatprep.mubr.f32.mxu0 0.0
          %658 = vmatmul.mubr.f32.gmra.mrb[0].mxu0 %v586
          %v659 = vpop.f32.mrb[0].mxu0
          %v660 = vadd.f32 %v579, %v659
          %v661 = vpop.f32.mrb[0].mxu0
          %662 = vdwg.mxu0
          %vm663 = vcmp.gt.f32.partialorder %v655, 0.0
          %vm664 = vcmp.gt.f32.partialorder %v660, 0.0
          %v665 = vmin.f32 %v655, 0.0
          %v666 = vmin.f32 %v660, 0.0
          %v667 = vmul.f32 %v665, 1.442695
          %v668 = vpow.pop %v667
          %v669 = vmul.f32 %v666, 1.442695
          %v670 = vpow.pop %v669
          %v671 = vsub.f32 %v668, 1.0
          %v672 = vsub.f32 %v670, 1.0
          %v673 = vsel %vm663, %v655, %v671
          %v674 = vsel %vm664, %v660, %v672
          %675 = vst.msk [vmem:[#allocation2] sm:$0xff] %vm411, %v673
          %676 = vst.msk [vmem:[#allocation2 + $0x8] sm:$0xff] %vm411, %v674
          %679 = vrot.lane.b32.xlu0 %v673, 120
          %v680 = vpop.permute.xlu0 %679
          %681 = vrot.lane.b32.xlu0 %v674, 120
          %v682 = vpop.permute.xlu0 %681
          %685 = vst.msk [vmem:[#allocation3] sm:$0xff] %vm411, %v680
          %686 = vst.msk [vmem:[#allocation3 + $0x8] sm:$0xff] %vm411, %v682
          %687 = vmatprep.subr.mxu0 0.0
          %688 = vmatpush1.msra.mxu0 %v405
          %689 = vmatprep.subr.mxu0 0.0
          %690 = vmatpush1.msra.mxu0 %v406
          %691 = vmatprep.subr.mxu0 0.0
          %692 = vmatpush1.msra.mxu0 0.0
          %693 = vmatprep.subr.mxu0 0.0
          %694 = vmatpush1.msra.mxu0 0.0
          %695 = vmatprep.subr.mxu0 0.0
          %696 = vmatpush1.msra.mxu0 0.0
          %697 = vmatprep.subr.mxu0 0.0
          %698 = vmatpush1.msra.mxu0 0.0
          %699 = vmatprep.subr.mxu0 0.0
          %700 = vmatpush1.msra.mxu0 0.0
          %701 = vmatprep.subr.mxu0 0.0
          %702 = vmatpush1.msra.mxu0 0.0
          %703 = vmatprep.subr.mxu0 0.0
          %704 = vmatpush1.msra.mxu0 0.0
          %705 = vmatprep.subr.mxu0 0.0
          %706 = vmatpush1.msra.mxu0 0.0
          %707 = vmatprep.subr.mxu0 0.0
          %708 = vmatpush1.msra.mxu0 0.0
          %709 = vmatprep.subr.mxu0 0.0
          %710 = vmatpush1.msra.mxu0 0.0
          %711 = vmatprep.subr.mxu0 0.0
          %712 = vmatpush1.msra.mxu0 0.0
          %713 = vmatprep.subr.mxu0 0.0
          %714 = vmatpush1.msra.mxu0 0.0
          %715 = vmatprep.subr.mxu0 0.0
          %716 = vmatpush1.msra.mxu0 0.0
          %717 = vmatprep.subr.mxu0 0.0
          %718 = vmatpush1.msra.mxu0 0.0
          %719 = vmatprep.subr.mxu0 0.0
          %720 = vmatpush1.msra.mxu0 0.0
          %721 = vmatprep.subr.mxu0 0.0
          %722 = vmatpush1.msra.mxu0 0.0
          %723 = vmatprep.subr.mxu0 0.0
          %724 = vmatpush1.msra.mxu0 0.0
          %725 = vmatprep.subr.mxu0 0.0
          %726 = vmatpush1.msra.mxu0 0.0
          %727 = vmatprep.subr.mxu0 0.0
          %728 = vmatpush1.msra.mxu0 0.0
          %729 = vmatprep.subr.mxu0 0.0
          %730 = vmatpush1.msra.mxu0 0.0
          %731 = vmatprep.subr.mxu0 0.0
          %732 = vmatpush1.msra.mxu0 0.0
          %733 = vmatprep.subr.mxu0 0.0
          %734 = vmatpush1.msra.mxu0 0.0
          %735 = vmatprep.subr.mxu0 0.0
          %736 = vmatpush1.msra.mxu0 0.0
          %737 = vmatprep.subr.mxu0 0.0
          %738 = vmatpush1.msra.mxu0 0.0
          %739 = vmatprep.subr.mxu0 0.0
          %740 = vmatpush1.msra.mxu0 0.0
          %741 = vmatprep.subr.mxu0 0.0
          %742 = vmatpush1.msra.mxu0 0.0
          %743 = vmatprep.subr.mxu0 0.0
          %744 = vmatpush1.msra.mxu0 0.0
          %745 = vmatprep.subr.mxu0 0.0
          %746 = vmatpush1.msra.mxu0 0.0
          %747 = vmatprep.subr.mxu0 0.0
          %748 = vmatpush1.msra.mxu0 0.0
          %749 = vmatprep.subr.mxu0 0.0
          %750 = vmatpush1.msra.mxu0 0.0
          %751 = vmatprep.mubr.f32.mxu0 0.0
          %752 = vmatmul.mubr.f32.gmra.mrb[0].mxu0 %v583
          %v753 = vpop.f32.mrb[0].mxu0
          %v754 = vadd.f32 0.0, %v753
          %v755 = vpop.f32.mrb[0].mxu0
          %756 = vmatprep.mubr.f32.mxu0 0.0
          %757 = vmatmul.mubr.f32.gmra.mrb[0].mxu0 %v586
          %v758 = vpop.f32.mrb[0].mxu0
          %v759 = vadd.f32 0.0, %v758
          %v760 = vpop.f32.mrb[0].mxu0
          %761 = vdwg.mxu0
          %v762 = vld [vmem:[#allocation14] sm:$0xff]
          %v763 = vld [vmem:[#allocation17] sm:$0x1]
          %v765 = vlaneseq
          %v766 = vshrl.u32 %v765, 7
          %v767 = vsub.s32 0, %v766
          %v768 = vrot.slane %v763, %v767
          %v771 = vsel %vm411, %v754, 0
          %v774 = vsel %vm411, %v759, 0
          %776 = vmatprep.subr.mxu0 0.0
          %777 = vmatpush1.msra.mxu0 %v762
          %778 = vmatprep.subr.mxu0 0.0
          %779 = vmatpush1.msra.mxu0 0.0
          %780 = vmatprep.subr.mxu0 0.0
          %781 = vmatpush1.msra.mxu0 0.0
          %782 = vmatprep.subr.mxu0 0.0
          %783 = vmatpush1.msra.mxu0 0.0
          %784 = vmatprep.subr.mxu0 0.0
          %785 = vmatpush1.msra.mxu0 0.0
          %786 = vmatprep.subr.mxu0 0.0
          %787 = vmatpush1.msra.mxu0 0.0
          %788 = vmatprep.subr.mxu0 0.0
          %789 = vmatpush1.msra.mxu0 0.0
          %790 = vmatprep.subr.mxu0 0.0
          %791 = vmatpush1.msra.mxu0 0.0
          %792 = vmatprep.subr.mxu0 0.0
          %793 = vmatpush1.msra.mxu0 0.0
          %794 = vmatprep.subr.mxu0 0.0
          %795 = vmatpush1.msra.mxu0 0.0
          %796 = vmatprep.subr.mxu0 0.0
          %797 = vmatpush1.msra.mxu0 0.0
          %798 = vmatprep.subr.mxu0 0.0
          %799 = vmatpush1.msra.mxu0 0.0
          %800 = vmatprep.subr.mxu0 0.0
          %801 = vmatpush1.msra.mxu0 0.0
          %802 = vmatprep.subr.mxu0 0.0
          %803 = vmatpush1.msra.mxu0 0.0
          %804 = vmatprep.subr.mxu0 0.0
          %805 = vmatpush1.msra.mxu0 0.0
          %806 = vmatprep.subr.mxu0 0.0
          %807 = vmatpush1.msra.mxu0 0.0
          %808 = vmatprep.subr.mxu0 0.0
          %809 = vmatpush1.msra.mxu0 0.0
          %810 = vmatprep.subr.mxu0 0.0
          %811 = vmatpush1.msra.mxu0 0.0
          %812 = vmatprep.subr.mxu0 0.0
          %813 = vmatpush1.msra.mxu0 0.0
          %814 = vmatprep.subr.mxu0 0.0
          %815 = vmatpush1.msra.mxu0 0.0
          %816 = vmatprep.subr.mxu0 0.0
          %817 = vmatpush1.msra.mxu0 0.0
          %818 = vmatprep.subr.mxu0 0.0
          %819 = vmatpush1.msra.mxu0 0.0
          %820 = vmatprep.subr.mxu0 0.0
          %821 = vmatpush1.msra.mxu0 0.0
          %822 = vmatprep.subr.mxu0 0.0
          %823 = vmatpush1.msra.mxu0 0.0
          %824 = vmatprep.subr.mxu0 0.0
          %825 = vmatpush1.msra.mxu0 0.0
          %826 = vmatprep.subr.mxu0 0.0
          %827 = vmatpush1.msra.mxu0 0.0
          %828 = vmatprep.subr.mxu0 0.0
          %829 = vmatpush1.msra.mxu0 0.0
          %830 = vmatprep.subr.mxu0 0.0
          %831 = vmatpush1.msra.mxu0 0.0
          %832 = vmatprep.subr.mxu0 0.0
          %833 = vmatpush1.msra.mxu0 0.0
          %834 = vmatprep.subr.mxu0 0.0
          %835 = vmatpush1.msra.mxu0 0.0
          %836 = vmatprep.subr.mxu0 0.0
          %837 = vmatpush1.msra.mxu0 0.0
          %838 = vmatprep.subr.mxu0 0.0
          %839 = vmatpush1.msra.mxu0 0.0
          %840 = vmatprep.mubr.f32.mxu0 0.0
          %841 = vmatmul.mubr.f32.gmra.mrb[0].mxu0 %v771
          %v842 = vpop.f32.mrb[0].mxu0
          %v843 = vadd.f32 %v768, %v842
          %v844 = vpop.f32.mrb[0].mxu0
          %845 = vmatprep.mubr.f32.mxu0 0.0
          %846 = vmatmul.mubr.f32.gmra.mrb[0].mxu0 %v774
          %v847 = vpop.f32.mrb[0].mxu0
          %v848 = vadd.f32 %v768, %v847
          %v849 = vpop.f32.mrb[0].mxu0
          %850 = vdwg.mxu0
          %851 = vst.msk [vmem:[#allocation4] sm:$0xff] %vm411, %v843
          %852 = vst.msk [vmem:[#allocation4 + $0x8] sm:$0xff] %vm411, %v848
          %s853 = scalar_lea.vmem [#allocation14], 8
          %v854 = vld [vmem:[%s853] sm:$0xff]
          %s855 = scalar_lea.vmem [#allocation17], 1
          %v856 = vld [vmem:[%s855] sm:$0x1]
          %v858 = vlaneseq
          %v859 = vshrl.u32 %v858, 7
          %v860 = vsub.s32 0, %v859
          %v861 = vrot.slane %v856, %v860
          %863 = vmatprep.subr.mxu0 0.0
          %864 = vmatpush1.msra.mxu0 %v854
          %865 = vmatprep.subr.mxu0 0.0
          %866 = vmatpush1.msra.mxu0 0.0
          %867 = vmatprep.subr.mxu0 0.0
          %868 = vmatpush1.msra.mxu0 0.0
          %869 = vmatprep.subr.mxu0 0.0
          %870 = vmatpush1.msra.mxu0 0.0
          %871 = vmatprep.subr.mxu0 0.0
          %872 = vmatpush1.msra.mxu0 0.0
          %873 = vmatprep.subr.mxu0 0.0
          %874 = vmatpush1.msra.mxu0 0.0
          %875 = vmatprep.subr.mxu0 0.0
          %876 = vmatpush1.msra.mxu0 0.0
          %877 = vmatprep.subr.mxu0 0.0
          %878 = vmatpush1.msra.mxu0 0.0
          %879 = vmatprep.subr.mxu0 0.0
          %880 = vmatpush1.msra.mxu0 0.0
          %881 = vmatprep.subr.mxu0 0.0
          %882 = vmatpush1.msra.mxu0 0.0
          %883 = vmatprep.subr.mxu0 0.0
          %884 = vmatpush1.msra.mxu0 0.0
          %885 = vmatprep.subr.mxu0 0.0
          %886 = vmatpush1.msra.mxu0 0.0
          %887 = vmatprep.subr.mxu0 0.0
          %888 = vmatpush1.msra.mxu0 0.0
          %889 = vmatprep.subr.mxu0 0.0
          %890 = vmatpush1.msra.mxu0 0.0
          %891 = vmatprep.subr.mxu0 0.0
          %892 = vmatpush1.msra.mxu0 0.0
          %893 = vmatprep.subr.mxu0 0.0
          %894 = vmatpush1.msra.mxu0 0.0
          %895 = vmatprep.subr.mxu0 0.0
          %896 = vmatpush1.msra.mxu0 0.0
          %897 = vmatprep.subr.mxu0 0.0
          %898 = vmatpush1.msra.mxu0 0.0
          %899 = vmatprep.subr.mxu0 0.0
          %900 = vmatpush1.msra.mxu0 0.0
          %901 = vmatprep.subr.mxu0 0.0
          %902 = vmatpush1.msra.mxu0 0.0
          %903 = vmatprep.subr.mxu0 0.0
          %904 = vmatpush1.msra.mxu0 0.0
          %905 = vmatprep.subr.mxu0 0.0
          %906 = vmatpush1.msra.mxu0 0.0
          %907 = vmatprep.subr.mxu0 0.0
          %908 = vmatpush1.msra.mxu0 0.0
          %909 = vmatprep.subr.mxu0 0.0
          %910 = vmatpush1.msra.mxu0 0.0
          %911 = vmatprep.subr.mxu0 0.0
          %912 = vmatpush1.msra.mxu0 0.0
          %913 = vmatprep.subr.mxu0 0.0
          %914 = vmatpush1.msra.mxu0 0.0
          %915 = vmatprep.subr.mxu0 0.0
          %916 = vmatpush1.msra.mxu0 0.0
          %917 = vmatprep.subr.mxu0 0.0
          %918 = vmatpush1.msra.mxu0 0.0
          %919 = vmatprep.subr.mxu0 0.0
          %920 = vmatpush1.msra.mxu0 0.0
          %921 = vmatprep.subr.mxu0 0.0
          %922 = vmatpush1.msra.mxu0 0.0
          %923 = vmatprep.subr.mxu0 0.0
          %924 = vmatpush1.msra.mxu0 0.0
          %925 = vmatprep.subr.mxu0 0.0
          %926 = vmatpush1.msra.mxu0 0.0
          %927 = vmatprep.mubr.f32.mxu0 0.0
          %928 = vmatmul.mubr.f32.gmra.mrb[0].mxu0 %v771
          %v929 = vpop.f32.mrb[0].mxu0
          %v930 = vadd.f32 %v861, %v929
          %v931 = vpop.f32.mrb[0].mxu0
          %932 = vmatprep.mubr.f32.mxu0 0.0
          %933 = vmatmul.mubr.f32.gmra.mrb[0].mxu0 %v774
          %v934 = vpop.f32.mrb[0].mxu0
          %v935 = vadd.f32 %v861, %v934
          %v936 = vpop.f32.mrb[0].mxu0
          %937 = vdwg.mxu0
          %s938 = scalar_lea.vmem [#allocation4], 16
          %939 = vst.msk [vmem:[%s938] sm:$0xff] %vm411, %v930
          %940 = vst.msk [vmem:[%s938 + $0x8] sm:$0xff] %vm411, %v935
          %s941 = scalar_lea.vmem [#allocation14], 16
          %v942 = vld [vmem:[%s941] sm:$0xff]
          %s943 = scalar_lea.vmem [#allocation17], 2
          %v944 = vld [vmem:[%s943] sm:$0x1]
          %v946 = vlaneseq
          %v947 = vshrl.u32 %v946, 7
          %v948 = vsub.s32 0, %v947
          %v949 = vrot.slane %v944, %v948
          %951 = vmatprep.subr.mxu0 0.0
          %952 = vmatpush1.msra.mxu0 %v942
          %953 = vmatprep.subr.mxu0 0.0
          %954 = vmatpush1.msra.mxu0 0.0
          %955 = vmatprep.subr.mxu0 0.0
          %956 = vmatpush1.msra.mxu0 0.0
          %957 = vmatprep.subr.mxu0 0.0
          %958 = vmatpush1.msra.mxu0 0.0
          %959 = vmatprep.subr.mxu0 0.0
          %960 = vmatpush1.msra.mxu0 0.0
          %961 = vmatprep.subr.mxu0 0.0
          %962 = vmatpush1.msra.mxu0 0.0
          %963 = vmatprep.subr.mxu0 0.0
          %964 = vmatpush1.msra.mxu0 0.0
          %965 = vmatprep.subr.mxu0 0.0
          %966 = vmatpush1.msra.mxu0 0.0
          %967 = vmatprep.subr.mxu0 0.0
          %968 = vmatpush1.msra.mxu0 0.0
          %969 = vmatprep.subr.mxu0 0.0
          %970 = vmatpush1.msra.mxu0 0.0
          %971 = vmatprep.subr.mxu0 0.0
          %972 = vmatpush1.msra.mxu0 0.0
          %973 = vmatprep.subr.mxu0 0.0
          %974 = vmatpush1.msra.mxu0 0.0
          %975 = vmatprep.subr.mxu0 0.0
          %976 = vmatpush1.msra.mxu0 0.0
          %977 = vmatprep.subr.mxu0 0.0
          %978 = vmatpush1.msra.mxu0 0.0
          %979 = vmatprep.subr.mxu0 0.0
          %980 = vmatpush1.msra.mxu0 0.0
          %981 = vmatprep.subr.mxu0 0.0
          %982 = vmatpush1.msra.mxu0 0.0
          %983 = vmatprep.subr.mxu0 0.0
          %984 = vmatpush1.msra.mxu0 0.0
          %985 = vmatprep.subr.mxu0 0.0
          %986 = vmatpush1.msra.mxu0 0.0
          %987 = vmatprep.subr.mxu0 0.0
          %988 = vmatpush1.msra.mxu0 0.0
          %989 = vmatprep.subr.mxu0 0.0
          %990 = vmatpush1.msra.mxu0 0.0
          %991 = vmatprep.subr.mxu0 0.0
          %992 = vmatpush1.msra.mxu0 0.0
          %993 = vmatprep.subr.mxu0 0.0
          %994 = vmatpush1.msra.mxu0 0.0
          %995 = vmatprep.subr.mxu0 0.0
          %996 = vmatpush1.msra.mxu0 0.0
          %997 = vmatprep.subr.mxu0 0.0
          %998 = vmatpush1.msra.mxu0 0.0
          %999 = vmatprep.subr.mxu0 0.0
          %1000 = vmatpush1.msra.mxu0 0.0
          %1001 = vmatprep.subr.mxu0 0.0
          %1002 = vmatpush1.msra.mxu0 0.0
          %1003 = vmatprep.subr.mxu0 0.0
          %1004 = vmatpush1.msra.mxu0 0.0
          %1005 = vmatprep.subr.mxu0 0.0
          %1006 = vmatpush1.msra.mxu0 0.0
          %1007 = vmatprep.subr.mxu0 0.0
          %1008 = vmatpush1.msra.mxu0 0.0
          %1009 = vmatprep.subr.mxu0 0.0
          %1010 = vmatpush1.msra.mxu0 0.0
          %1011 = vmatprep.subr.mxu0 0.0
          %1012 = vmatpush1.msra.mxu0 0.0
          %1013 = vmatprep.subr.mxu0 0.0
          %1014 = vmatpush1.msra.mxu0 0.0
          %1015 = vmatprep.mubr.f32.mxu0 0.0
          %1016 = vmatmul.mubr.f32.gmra.mrb[0].mxu0 %v771
          %v1017 = vpop.f32.mrb[0].mxu0
          %v1018 = vadd.f32 %v949, %v1017
          %v1019 = vpop.f32.mrb[0].mxu0
          %1020 = vmatprep.mubr.f32.mxu0 0.0
          %1021 = vmatmul.mubr.f32.gmra.mrb[0].mxu0 %v774
          %v1022 = vpop.f32.mrb[0].mxu0
          %v1023 = vadd.f32 %v949, %v1022
          %v1024 = vpop.f32.mrb[0].mxu0
          %1025 = vdwg.mxu0
          %s1026 = scalar_lea.vmem [#allocation4], 32
          %1027 = vst.msk [vmem:[%s1026] sm:$0xff] %vm411, %v1018
          %1028 = vst.msk [vmem:[%s1026 + $0x8] sm:$0xff] %vm411, %v1023
          %s1029 = scalar_lea.vmem [#allocation14], 24
          %v1030 = vld [vmem:[%s1029] sm:$0xff]
          %s1031 = scalar_lea.vmem [#allocation17], 3
          %v1032 = vld [vmem:[%s1031] sm:$0x1]
          %v1034 = vlaneseq
          %v1035 = vshrl.u32 %v1034, 7
          %v1036 = vsub.s32 0, %v1035
          %v1037 = vrot.slane %v1032, %v1036
          %1039 = vmatprep.subr.mxu0 0.0
          %1040 = vmatpush1.msra.mxu0 %v1030
          %1041 = vmatprep.subr.mxu0 0.0
          %1042 = vmatpush1.msra.mxu0 0.0
          %1043 = vmatprep.subr.mxu0 0.0
          %1044 = vmatpush1.msra.mxu0 0.0
          %1045 = vmatprep.subr.mxu0 0.0
          %1046 = vmatpush1.msra.mxu0 0.0
          %1047 = vmatprep.subr.mxu0 0.0
          %1048 = vmatpush1.msra.mxu0 0.0
          %1049 = vmatprep.subr.mxu0 0.0
          %1050 = vmatpush1.msra.mxu0 0.0
          %1051 = vmatprep.subr.mxu0 0.0
          %1052 = vmatpush1.msra.mxu0 0.0
          %1053 = vmatprep.subr.mxu0 0.0
          %1054 = vmatpush1.msra.mxu0 0.0
          %1055 = vmatprep.subr.mxu0 0.0
          %1056 = vmatpush1.msra.mxu0 0.0
          %1057 = vmatprep.subr.mxu0 0.0
          %1058 = vmatpush1.msra.mxu0 0.0
          %1059 = vmatprep.subr.mxu0 0.0
          %1060 = vmatpush1.msra.mxu0 0.0
          %1061 = vmatprep.subr.mxu0 0.0
          %1062 = vmatpush1.msra.mxu0 0.0
          %1063 = vmatprep.subr.mxu0 0.0
          %1064 = vmatpush1.msra.mxu0 0.0
          %1065 = vmatprep.subr.mxu0 0.0
          %1066 = vmatpush1.msra.mxu0 0.0
          %1067 = vmatprep.subr.mxu0 0.0
          %1068 = vmatpush1.msra.mxu0 0.0
          %1069 = vmatprep.subr.mxu0 0.0
          %1070 = vmatpush1.msra.mxu0 0.0
          %1071 = vmatprep.subr.mxu0 0.0
          %1072 = vmatpush1.msra.mxu0 0.0
          %1073 = vmatprep.subr.mxu0 0.0
          %1074 = vmatpush1.msra.mxu0 0.0
          %1075 = vmatprep.subr.mxu0 0.0
          %1076 = vmatpush1.msra.mxu0 0.0
          %1077 = vmatprep.subr.mxu0 0.0
          %1078 = vmatpush1.msra.mxu0 0.0
          %1079 = vmatprep.subr.mxu0 0.0
          %1080 = vmatpush1.msra.mxu0 0.0
          %1081 = vmatprep.subr.mxu0 0.0
          %1082 = vmatpush1.msra.mxu0 0.0
          %1083 = vmatprep.subr.mxu0 0.0
          %1084 = vmatpush1.msra.mxu0 0.0
          %1085 = vmatprep.subr.mxu0 0.0
          %1086 = vmatpush1.msra.mxu0 0.0
          %1087 = vmatprep.subr.mxu0 0.0
          %1088 = vmatpush1.msra.mxu0 0.0
          %1089 = vmatprep.subr.mxu0 0.0
          %1090 = vmatpush1.msra.mxu0 0.0
          %1091 = vmatprep.subr.mxu0 0.0
          %1092 = vmatpush1.msra.mxu0 0.0
          %1093 = vmatprep.subr.mxu0 0.0
          %1094 = vmatpush1.msra.mxu0 0.0
          %1095 = vmatprep.subr.mxu0 0.0
          %1096 = vmatpush1.msra.mxu0 0.0
          %1097 = vmatprep.subr.mxu0 0.0
          %1098 = vmatpush1.msra.mxu0 0.0
          %1099 = vmatprep.subr.mxu0 0.0
          %1100 = vmatpush1.msra.mxu0 0.0
          %1101 = vmatprep.subr.mxu0 0.0
          %1102 = vmatpush1.msra.mxu0 0.0
          %1103 = vmatprep.mubr.f32.mxu0 0.0
          %1104 = vmatmul.mubr.f32.gmra.mrb[0].mxu0 %v771
          %v1105 = vpop.f32.mrb[0].mxu0
          %v1106 = vadd.f32 %v1037, %v1105
          %v1107 = vpop.f32.mrb[0].mxu0
          %1108 = vmatprep.mubr.f32.mxu0 0.0
          %1109 = vmatmul.mubr.f32.gmra.mrb[0].mxu0 %v774
          %v1110 = vpop.f32.mrb[0].mxu0
          %v1111 = vadd.f32 %v1037, %v1110
          %v1112 = vpop.f32.mrb[0].mxu0
          %1113 = vdwg.mxu0
          %s1114 = scalar_lea.vmem [#allocation4], 48
          %1115 = vst.msk [vmem:[%s1114] sm:$0xff] %vm411, %v1106
          %1116 = vst.msk [vmem:[%s1114 + $0x8] sm:$0xff] %vm411, %v1111
        $region88: #{tpu_custom_call.1} parent=51 // pred_fallthru
          _
        %v1117 = vld [vmem:[#allocation2] sm:$0xff]
        %v1118 = vld [vmem:[#allocation2 + $0x8] sm:$0xff]
        %v1119 = vld [vmem:[#allocation3] sm:$0xff]
        %v1120 = vld [vmem:[#allocation3 + $0x8] sm:$0xff]
        %vm1121 = vcmask 130048
        %v1123 = vsel %vm1121, %v399, 0
        %v1126 = vsel %vm1121, %v400, 0
        %1128 = vmatprep.subr.mxu0 0.0
        %1129 = vmatpush1.msra.mxu0 %v1117
        %1130 = vmatprep.subr.mxu0 0.0
        %1131 = vmatpush1.msra.mxu0 %v1118
        %1132 = vmatprep.subr.mxu0 0.0
        %1133 = vmatpush1.msra.mxu0 0.0
        %1134 = vmatprep.subr.mxu0 0.0
        %1135 = vmatpush1.msra.mxu0 0.0
        %1136 = vmatprep.subr.mxu0 0.0
        %1137 = vmatpush1.msra.mxu0 0.0
        %1138 = vmatprep.subr.mxu0 0.0
        %1139 = vmatpush1.msra.mxu0 0.0
        %1140 = vmatprep.subr.mxu0 0.0
        %1141 = vmatpush1.msra.mxu0 0.0
        %1142 = vmatprep.subr.mxu0 0.0
        %1143 = vmatpush1.msra.mxu0 0.0
        %1144 = vmatprep.subr.mxu0 0.0
        %1145 = vmatpush1.msra.mxu0 0.0
        %1146 = vmatprep.subr.mxu0 0.0
        %1147 = vmatpush1.msra.mxu0 0.0
        %1148 = vmatprep.subr.mxu0 0.0
        %1149 = vmatpush1.msra.mxu0 0.0
        %1150 = vmatprep.subr.mxu0 0.0
        %1151 = vmatpush1.msra.mxu0 0.0
        %1152 = vmatprep.subr.mxu0 0.0
        %1153 = vmatpush1.msra.mxu0 0.0
        %1154 = vmatprep.subr.mxu0 0.0
        %1155 = vmatpush1.msra.mxu0 0.0
        %1156 = vmatprep.subr.mxu0 0.0
        %1157 = vmatpush1.msra.mxu0 0.0
        %1158 = vmatprep.subr.mxu0 0.0
        %1159 = vmatpush1.msra.mxu0 0.0
        %1160 = vmatprep.subr.mxu0 0.0
        %1161 = vmatpush1.msra.mxu0 0.0
        %1162 = vmatprep.subr.mxu0 0.0
        %1163 = vmatpush1.msra.mxu0 0.0
        %1164 = vmatprep.subr.mxu0 0.0
        %1165 = vmatpush1.msra.mxu0 0.0
        %1166 = vmatprep.subr.mxu0 0.0
        %1167 = vmatpush1.msra.mxu0 0.0
        %1168 = vmatprep.subr.mxu0 0.0
        %1169 = vmatpush1.msra.mxu0 0.0
        %1170 = vmatprep.subr.mxu0 0.0
        %1171 = vmatpush1.msra.mxu0 0.0
        %1172 = vmatprep.subr.mxu0 0.0
        %1173 = vmatpush1.msra.mxu0 0.0
        %1174 = vmatprep.subr.mxu0 0.0
        %1175 = vmatpush1.msra.mxu0 0.0
        %1176 = vmatprep.subr.mxu0 0.0
        %1177 = vmatpush1.msra.mxu0 0.0
        %1178 = vmatprep.subr.mxu0 0.0
        %1179 = vmatpush1.msra.mxu0 0.0
        %1180 = vmatprep.subr.mxu0 0.0
        %1181 = vmatpush1.msra.mxu0 0.0
        %1182 = vmatprep.subr.mxu0 0.0
        %1183 = vmatpush1.msra.mxu0 0.0
        %1184 = vmatprep.subr.mxu0 0.0
        %1185 = vmatpush1.msra.mxu0 0.0
        %1186 = vmatprep.subr.mxu0 0.0
        %1187 = vmatpush1.msra.mxu0 0.0
        %1188 = vmatprep.subr.mxu0 0.0
        %1189 = vmatpush1.msra.mxu0 0.0
        %1190 = vmatprep.subr.mxu0 0.0
        %1191 = vmatpush1.msra.mxu0 0.0
        %1192 = vmatprep.mubr.f32.mxu0 0.0
        %1193 = vmatmul.mubr.f32.gmra.mrb[0].mxu0 %v1123
        %v1194 = vpop.f32.mrb[0].mxu0
        %v1195 = vadd.f32 0.0, %v1194
        %v1196 = vpop.f32.mrb[0].mxu0
        %1197 = vmatprep.mubr.f32.mxu0 0.0
        %1198 = vmatmul.mubr.f32.gmra.mrb[0].mxu0 %v1126
        %v1199 = vpop.f32.mrb[0].mxu0
        %v1200 = vadd.f32 0.0, %v1199
        %v1201 = vpop.f32.mrb[0].mxu0
        %1202 = vdwg.mxu0
        %v1203 = vld [vmem:[#allocation16] sm:$0xff]
        %v1204 = vld [vmem:[#allocation4] sm:$0xff]
        %v1205 = vld [vmem:[#allocation4 + $0x8] sm:$0xff]
        %vm1206 = vcmask 64512
        %v1208 = vsel %vm1206, %v1195, 0
        %v1211 = vsel %vm1206, %v1200, 0
        %1213 = vmatprep.subr.mxu0 0.0
        %1214 = vmatpush1.msra.mxu0 %v1203
        %1215 = vmatprep.subr.mxu0 0.0
        %1216 = vmatpush1.msra.mxu0 0.0
        %1217 = vmatprep.subr.mxu0 0.0
        %1218 = vmatpush1.msra.mxu0 0.0
        %1219 = vmatprep.subr.mxu0 0.0
        %1220 = vmatpush1.msra.mxu0 0.0
        %1221 = vmatprep.subr.mxu0 0.0
        %1222 = vmatpush1.msra.mxu0 0.0
        %1223 = vmatprep.subr.mxu0 0.0
        %1224 = vmatpush1.msra.mxu0 0.0
        %1225 = vmatprep.subr.mxu0 0.0
        %1226 = vmatpush1.msra.mxu0 0.0
        %1227 = vmatprep.subr.mxu0 0.0
        %1228 = vmatpush1.msra.mxu0 0.0
        %1229 = vmatprep.subr.mxu0 0.0
        %1230 = vmatpush1.msra.mxu0 0.0
        %1231 = vmatprep.subr.mxu0 0.0
        %1232 = vmatpush1.msra.mxu0 0.0
        %1233 = vmatprep.subr.mxu0 0.0
        %1234 = vmatpush1.msra.mxu0 0.0
        %1235 = vmatprep.subr.mxu0 0.0
        %1236 = vmatpush1.msra.mxu0 0.0
        %1237 = vmatprep.subr.mxu0 0.0
        %1238 = vmatpush1.msra.mxu0 0.0
        %1239 = vmatprep.subr.mxu0 0.0
        %1240 = vmatpush1.msra.mxu0 0.0
        %1241 = vmatprep.subr.mxu0 0.0
        %1242 = vmatpush1.msra.mxu0 0.0
        %1243 = vmatprep.subr.mxu0 0.0
        %1244 = vmatpush1.msra.mxu0 0.0
        %1245 = vmatprep.subr.mxu0 0.0
        %1246 = vmatpush1.msra.mxu0 0.0
        %1247 = vmatprep.subr.mxu0 0.0
        %1248 = vmatpush1.msra.mxu0 0.0
        %1249 = vmatprep.subr.mxu0 0.0
        %1250 = vmatpush1.msra.mxu0 0.0
        %1251 = vmatprep.subr.mxu0 0.0
        %1252 = vmatpush1.msra.mxu0 0.0
        %1253 = vmatprep.subr.mxu0 0.0
        %1254 = vmatpush1.msra.mxu0 0.0
        %1255 = vmatprep.subr.mxu0 0.0
        %1256 = vmatpush1.msra.mxu0 0.0
        %1257 = vmatprep.subr.mxu0 0.0
        %1258 = vmatpush1.msra.mxu0 0.0
        %1259 = vmatprep.subr.mxu0 0.0
        %1260 = vmatpush1.msra.mxu0 0.0
        %1261 = vmatprep.subr.mxu0 0.0
        %1262 = vmatpush1.msra.mxu0 0.0
        %1263 = vmatprep.subr.mxu0 0.0
        %1264 = vmatpush1.msra.mxu0 0.0
        %1265 = vmatprep.subr.mxu0 0.0
        %1266 = vmatpush1.msra.mxu0 0.0
        %1267 = vmatprep.subr.mxu0 0.0
        %1268 = vmatpush1.msra.mxu0 0.0
        %1269 = vmatprep.subr.mxu0 0.0
        %1270 = vmatpush1.msra.mxu0 0.0
        %1271 = vmatprep.subr.mxu0 0.0
        %1272 = vmatpush1.msra.mxu0 0.0
        %1273 = vmatprep.subr.mxu0 0.0
        %1274 = vmatpush1.msra.mxu0 0.0
        %1275 = vmatprep.subr.mxu0 0.0
        %1276 = vmatpush1.msra.mxu0 0.0
        %1277 = vmatprep.mubr.f32.mxu0 0.0
        %1278 = vmatmul.mubr.f32.gmra.mrb[0].mxu0 %v1208
        %v1279 = vpop.f32.mrb[0].mxu0
        %v1280 = vadd.f32 %v1204, %v1279
        %v1281 = vpop.f32.mrb[0].mxu0
        %1282 = vmatprep.mubr.f32.mxu0 0.0
        %1283 = vmatmul.mubr.f32.gmra.mrb[0].mxu0 %v1211
        %v1284 = vpop.f32.mrb[0].mxu0
        %v1285 = vadd.f32 %v1205, %v1284
        %v1286 = vpop.f32.mrb[0].mxu0
        %1287 = vdwg.mxu0
        %v1288 = vxor.u32 %v1280, 2147483648
        %v1289 = vxor.u32 %v1285, 2147483648
        %v1290 = vmul.f32 %v1288, 1.442695
        %v1291 = vpow.pop %v1290
        %v1292 = vmul.f32 %v1289, 1.442695
        %v1293 = vpow.pop %v1292
        %v1294 = vadd.f32 %v1291, 1.0
        %v1295 = vadd.f32 %v1293, 1.0
        %v1296 = vrcp.pop %v1294
        %v1297 = vmul.f32 1.0, %v1296
        %v1298 = vrcp.pop %v1295
        %v1299 = vmul.f32 1.0, %v1298
        %s1300 = scalar_lea.vmem [#allocation16], 8
        %v1301 = vld [vmem:[%s1300] sm:$0xff]
        %s1302 = scalar_lea.vmem [#allocation4], 16
        %v1303 = vld [vmem:[%s1302] sm:$0xff]
        %v1304 = vld [vmem:[%s1302 + $0x8] sm:$0xff]
        %1305 = vmatprep.subr.mxu0 0.0
        %1306 = vmatpush1.msra.mxu0 %v1301
        %1307 = vmatprep.subr.mxu0 0.0
        %1308 = vmatpush1.msra.mxu0 0.0
        %1309 = vmatprep.subr.mxu0 0.0
        %1310 = vmatpush1.msra.mxu0 0.0
        %1311 = vmatprep.subr.mxu0 0.0
        %1312 = vmatpush1.msra.mxu0 0.0
        %1313 = vmatprep.subr.mxu0 0.0
        %1314 = vmatpush1.msra.mxu0 0.0
        %1315 = vmatprep.subr.mxu0 0.0
        %1316 = vmatpush1.msra.mxu0 0.0
        %1317 = vmatprep.subr.mxu0 0.0
        %1318 = vmatpush1.msra.mxu0 0.0
        %1319 = vmatprep.subr.mxu0 0.0
        %1320 = vmatpush1.msra.mxu0 0.0
        %1321 = vmatprep.subr.mxu0 0.0
        %1322 = vmatpush1.msra.mxu0 0.0
        %1323 = vmatprep.subr.mxu0 0.0
        %1324 = vmatpush1.msra.mxu0 0.0
        %1325 = vmatprep.subr.mxu0 0.0
        %1326 = vmatpush1.msra.mxu0 0.0
        %1327 = vmatprep.subr.mxu0 0.0
        %1328 = vmatpush1.msra.mxu0 0.0
        %1329 = vmatprep.subr.mxu0 0.0
        %1330 = vmatpush1.msra.mxu0 0.0
        %1331 = vmatprep.subr.mxu0 0.0
        %1332 = vmatpush1.msra.mxu0 0.0
        %1333 = vmatprep.subr.mxu0 0.0
        %1334 = vmatpush1.msra.mxu0 0.0
        %1335 = vmatprep.subr.mxu0 0.0
        %1336 = vmatpush1.msra.mxu0 0.0
        %1337 = vmatprep.subr.mxu0 0.0
        %1338 = vmatpush1.msra.mxu0 0.0
        %1339 = vmatprep.subr.mxu0 0.0
        %1340 = vmatpush1.msra.mxu0 0.0
        %1341 = vmatprep.subr.mxu0 0.0
        %1342 = vmatpush1.msra.mxu0 0.0
        %1343 = vmatprep.subr.mxu0 0.0
        %1344 = vmatpush1.msra.mxu0 0.0
        %1345 = vmatprep.subr.mxu0 0.0
        %1346 = vmatpush1.msra.mxu0 0.0
        %1347 = vmatprep.subr.mxu0 0.0
        %1348 = vmatpush1.msra.mxu0 0.0
        %1349 = vmatprep.subr.mxu0 0.0
        %1350 = vmatpush1.msra.mxu0 0.0
        %1351 = vmatprep.subr.mxu0 0.0
        %1352 = vmatpush1.msra.mxu0 0.0
        %1353 = vmatprep.subr.mxu0 0.0
        %1354 = vmatpush1.msra.mxu0 0.0
        %1355 = vmatprep.subr.mxu0 0.0
        %1356 = vmatpush1.msra.mxu0 0.0
        %1357 = vmatprep.subr.mxu0 0.0
        %1358 = vmatpush1.msra.mxu0 0.0
        %1359 = vmatprep.subr.mxu0 0.0
        %1360 = vmatpush1.msra.mxu0 0.0
        %1361 = vmatprep.subr.mxu0 0.0
        %1362 = vmatpush1.msra.mxu0 0.0
        %1363 = vmatprep.subr.mxu0 0.0
        %1364 = vmatpush1.msra.mxu0 0.0
        %1365 = vmatprep.subr.mxu0 0.0
        %1366 = vmatpush1.msra.mxu0 0.0
        %1367 = vmatprep.subr.mxu0 0.0
        %1368 = vmatpush1.msra.mxu0 0.0
        %1369 = vmatprep.mubr.f32.mxu0 0.0
        %1370 = vmatmul.mubr.f32.gmra.mrb[0].mxu0 %v1208
        %v1371 = vpop.f32.mrb[0].mxu0
        %v1372 = vadd.f32 %v1303, %v1371
        %v1373 = vpop.f32.mrb[0].mxu0
        %1374 = vmatprep.mubr.f32.mxu0 0.0
        %1375 = vmatmul.mubr.f32.gmra.mrb[0].mxu0 %v1211
        %v1376 = vpop.f32.mrb[0].mxu0
        %v1377 = vadd.f32 %v1304, %v1376
        %v1378 = vpop.f32.mrb[0].mxu0
        %1379 = vdwg.mxu0
        %v1380 = vxor.u32 %v1372, 2147483648
        %v1381 = vxor.u32 %v1377, 2147483648
        %v1382 = vmul.f32 %v1380, 1.442695
        %v1383 = vpow.pop %v1382
        %v1384 = vmul.f32 %v1381, 1.442695
        %v1385 = vpow.pop %v1384
        %v1386 = vadd.f32 %v1383, 1.0
        %v1387 = vadd.f32 %v1385, 1.0
        %v1388 = vrcp.pop %v1386
        %v1389 = vmul.f32 1.0, %v1388
        %v1390 = vrcp.pop %v1387
        %v1391 = vmul.f32 1.0, %v1390
        %s1392 = scalar_lea.vmem [#allocation16], 16
        %v1393 = vld [vmem:[%s1392] sm:$0xff]
        %s1394 = scalar_lea.vmem [#allocation4], 32
        %v1395 = vld [vmem:[%s1394] sm:$0xff]
        %v1396 = vld [vmem:[%s1394 + $0x8] sm:$0xff]
        %1397 = vmatprep.subr.mxu0 0.0
        %1398 = vmatpush1.msra.mxu0 %v1393
        %1399 = vmatprep.subr.mxu0 0.0
        %1400 = vmatpush1.msra.mxu0 0.0
        %1401 = vmatprep.subr.mxu0 0.0
        %1402 = vmatpush1.msra.mxu0 0.0
        %1403 = vmatprep.subr.mxu0 0.0
        %1404 = vmatpush1.msra.mxu0 0.0
        %1405 = vmatprep.subr.mxu0 0.0
        %1406 = vmatpush1.msra.mxu0 0.0
        %1407 = vmatprep.subr.mxu0 0.0
        %1408 = vmatpush1.msra.mxu0 0.0
        %1409 = vmatprep.subr.mxu0 0.0
        %1410 = vmatpush1.msra.mxu0 0.0
        %1411 = vmatprep.subr.mxu0 0.0
        %1412 = vmatpush1.msra.mxu0 0.0
        %1413 = vmatprep.subr.mxu0 0.0
        %1414 = vmatpush1.msra.mxu0 0.0
        %1415 = vmatprep.subr.mxu0 0.0
        %1416 = vmatpush1.msra.mxu0 0.0
        %1417 = vmatprep.subr.mxu0 0.0
        %1418 = vmatpush1.msra.mxu0 0.0
        %1419 = vmatprep.subr.mxu0 0.0
        %1420 = vmatpush1.msra.mxu0 0.0
        %1421 = vmatprep.subr.mxu0 0.0
        %1422 = vmatpush1.msra.mxu0 0.0
        %1423 = vmatprep.subr.mxu0 0.0
        %1424 = vmatpush1.msra.mxu0 0.0
        %1425 = vmatprep.subr.mxu0 0.0
        %1426 = vmatpush1.msra.mxu0 0.0
        %1427 = vmatprep.subr.mxu0 0.0
        %1428 = vmatpush1.msra.mxu0 0.0
        %1429 = vmatprep.subr.mxu0 0.0
        %1430 = vmatpush1.msra.mxu0 0.0
        %1431 = vmatprep.subr.mxu0 0.0
        %1432 = vmatpush1.msra.mxu0 0.0
        %1433 = vmatprep.subr.mxu0 0.0
        %1434 = vmatpush1.msra.mxu0 0.0
        %1435 = vmatprep.subr.mxu0 0.0
        %1436 = vmatpush1.msra.mxu0 0.0
        %1437 = vmatprep.subr.mxu0 0.0
        %1438 = vmatpush1.msra.mxu0 0.0
        %1439 = vmatprep.subr.mxu0 0.0
        %1440 = vmatpush1.msra.mxu0 0.0
        %1441 = vmatprep.subr.mxu0 0.0
        %1442 = vmatpush1.msra.mxu0 0.0
        %1443 = vmatprep.subr.mxu0 0.0
        %1444 = vmatpush1.msra.mxu0 0.0
        %1445 = vmatprep.subr.mxu0 0.0
        %1446 = vmatpush1.msra.mxu0 0.0
        %1447 = vmatprep.subr.mxu0 0.0
        %1448 = vmatpush1.msra.mxu0 0.0
        %1449 = vmatprep.subr.mxu0 0.0
        %1450 = vmatpush1.msra.mxu0 0.0
        %1451 = vmatprep.subr.mxu0 0.0
        %1452 = vmatpush1.msra.mxu0 0.0
        %1453 = vmatprep.subr.mxu0 0.0
        %1454 = vmatpush1.msra.mxu0 0.0
        %1455 = vmatprep.subr.mxu0 0.0
        %1456 = vmatpush1.msra.mxu0 0.0
        %1457 = vmatprep.subr.mxu0 0.0
        %1458 = vmatpush1.msra.mxu0 0.0
        %1459 = vmatprep.subr.mxu0 0.0
        %1460 = vmatpush1.msra.mxu0 0.0
        %1461 = vmatprep.mubr.f32.mxu0 0.0
        %1462 = vmatmul.mubr.f32.gmra.mrb[0].mxu0 %v1208
        %v1463 = vpop.f32.mrb[0].mxu0
        %v1464 = vadd.f32 %v1395, %v1463
        %v1465 = vpop.f32.mrb[0].mxu0
        %1466 = vmatprep.mubr.f32.mxu0 0.0
        %1467 = vmatmul.mubr.f32.gmra.mrb[0].mxu0 %v1211
        %v1468 = vpop.f32.mrb[0].mxu0
        %v1469 = vadd.f32 %v1396, %v1468
        %v1470 = vpop.f32.mrb[0].mxu0
        %1471 = vdwg.mxu0
        %v1472 = vxor.u32 %v1464, 2147483648
        %v1473 = vxor.u32 %v1469, 2147483648
        %v1474 = vmul.f32 %v1472, 1.442695
        %v1475 = vpow.pop %v1474
        %v1476 = vmul.f32 %v1473, 1.442695
        %v1477 = vpow.pop %v1476
        %v1478 = vadd.f32 %v1475, 1.0
        %v1479 = vadd.f32 %v1477, 1.0
        %v1480 = vrcp.pop %v1478
        %v1481 = vmul.f32 1.0, %v1480
        %v1482 = vrcp.pop %v1479
        %v1483 = vmul.f32 1.0, %v1482
        %s1484 = scalar_lea.vmem [#allocation16], 24
        %v1485 = vld [vmem:[%s1484] sm:$0xff]
        %s1486 = scalar_lea.vmem [#allocation4], 48
        %v1487 = vld [vmem:[%s1486] sm:$0xff]
        %v1488 = vld [vmem:[%s1486 + $0x8] sm:$0xff]
        %1489 = vmatprep.subr.mxu0 0.0
        %1490 = vmatpush1.msra.mxu0 %v1485
        %1491 = vmatprep.subr.mxu0 0.0
        %1492 = vmatpush1.msra.mxu0 0.0
        %1493 = vmatprep.subr.mxu0 0.0
        %1494 = vmatpush1.msra.mxu0 0.0
        %1495 = vmatprep.subr.mxu0 0.0
        %1496 = vmatpush1.msra.mxu0 0.0
        %1497 = vmatprep.subr.mxu0 0.0
        %1498 = vmatpush1.msra.mxu0 0.0
        %1499 = vmatprep.subr.mxu0 0.0
        %1500 = vmatpush1.msra.mxu0 0.0
        %1501 = vmatprep.subr.mxu0 0.0
        %1502 = vmatpush1.msra.mxu0 0.0
        %1503 = vmatprep.subr.mxu0 0.0
        %1504 = vmatpush1.msra.mxu0 0.0
        %1505 = vmatprep.subr.mxu0 0.0
        %1506 = vmatpush1.msra.mxu0 0.0
        %1507 = vmatprep.subr.mxu0 0.0
        %1508 = vmatpush1.msra.mxu0 0.0
        %1509 = vmatprep.subr.mxu0 0.0
        %1510 = vmatpush1.msra.mxu0 0.0
        %1511 = vmatprep.subr.mxu0 0.0
        %1512 = vmatpush1.msra.mxu0 0.0
        %1513 = vmatprep.subr.mxu0 0.0
        %1514 = vmatpush1.msra.mxu0 0.0
        %1515 = vmatprep.subr.mxu0 0.0
        %1516 = vmatpush1.msra.mxu0 0.0
        %1517 = vmatprep.subr.mxu0 0.0
        %1518 = vmatpush1.msra.mxu0 0.0
        %1519 = vmatprep.subr.mxu0 0.0
        %1520 = vmatpush1.msra.mxu0 0.0
        %1521 = vmatprep.subr.mxu0 0.0
        %1522 = vmatpush1.msra.mxu0 0.0
        %1523 = vmatprep.subr.mxu0 0.0
        %1524 = vmatpush1.msra.mxu0 0.0
        %1525 = vmatprep.subr.mxu0 0.0
        %1526 = vmatpush1.msra.mxu0 0.0
        %1527 = vmatprep.subr.mxu0 0.0
        %1528 = vmatpush1.msra.mxu0 0.0
        %1529 = vmatprep.subr.mxu0 0.0
        %1530 = vmatpush1.msra.mxu0 0.0
        %1531 = vmatprep.subr.mxu0 0.0
        %1532 = vmatpush1.msra.mxu0 0.0
        %1533 = vmatprep.subr.mxu0 0.0
        %1534 = vmatpush1.msra.mxu0 0.0
        %1535 = vmatprep.subr.mxu0 0.0
        %1536 = vmatpush1.msra.mxu0 0.0
        %1537 = vmatprep.subr.mxu0 0.0
        %1538 = vmatpush1.msra.mxu0 0.0
        %1539 = vmatprep.subr.mxu0 0.0
        %1540 = vmatpush1.msra.mxu0 0.0
        %1541 = vmatprep.subr.mxu0 0.0
        %1542 = vmatpush1.msra.mxu0 0.0
        %1543 = vmatprep.subr.mxu0 0.0
        %1544 = vmatpush1.msra.mxu0 0.0
        %1545 = vmatprep.subr.mxu0 0.0
        %1546 = vmatpush1.msra.mxu0 0.0
        %1547 = vmatprep.subr.mxu0 0.0
        %1548 = vmatpush1.msra.mxu0 0.0
        %1549 = vmatprep.subr.mxu0 0.0
        %1550 = vmatpush1.msra.mxu0 0.0
        %1551 = vmatprep.subr.mxu0 0.0
        %1552 = vmatpush1.msra.mxu0 0.0
        %1553 = vmatprep.mubr.f32.mxu0 0.0
        %1554 = vmatmul.mubr.f32.gmra.mrb[0].mxu0 %v1208
        %v1555 = vpop.f32.mrb[0].mxu0
        %v1556 = vadd.f32 %v1487, %v1555
        %v1557 = vpop.f32.mrb[0].mxu0
        %1558 = vmatprep.mubr.f32.mxu0 0.0
        %1559 = vmatmul.mubr.f32.gmra.mrb[0].mxu0 %v1211
        %v1560 = vpop.f32.mrb[0].mxu0
        %v1561 = vadd.f32 %v1488, %v1560
        %v1562 = vpop.f32.mrb[0].mxu0
        %1563 = vdwg.mxu0
        %v1564 = vtanh.pop %v1556
        %v1565 = vtanh.pop %v1561
        %v1566 = vmul.f32 %v1389, %v1119
        %v1567 = vmul.f32 %v1391, %v1120
        %v1568 = vmul.f32 %v1297, %v1564
        %v1569 = vmul.f32 %v1299, %v1565
        %v1570 = vadd.f32 %v1566, %v1568
        %v1571 = vadd.f32 %v1567, %v1569
        %v1572 = vtanh.pop %v1570
        %v1573 = vtanh.pop %v1571
        %v1574 = vmul.f32 %v1481, %v1572
        %v1575 = vmul.f32 %v1483, %v1573
        %1576 = vst.msk [vmem:[#allocation3] sm:$0xff] %vm1206, %v1570
        %1577 = vst.msk [vmem:[#allocation3 + $0x8] sm:$0xff] %vm1206, %v1571
        %1578 = vst.msk [vmem:[#allocation2] sm:$0xff] %vm1206, %v1574
        %1579 = vst.msk [vmem:[#allocation2 + $0x8] sm:$0xff] %vm1206, %v1575
        %1580 = vst.msk [vmem:[%s398] sm:$0xff] %vm1206, %v1574
        %1581 = vst.msk [vmem:[%s398 + $0x8] sm:$0xff] %vm1206, %v1575
        %s1582 = sand.u32 %s203, 1
        %s1583 = scalar_lea.sflag [#allocation7], %s1582
        %s1584 = sand.u32 %s203, 1
        %s1585 = smul.addr %s1584, 16
        %s1586 = scalar_lea.vmem [#allocation19], %s1585
        // Predicated region
        $region89: #{tpu_custom_call.1} parent=51 // pred_check
          %p1587 = pneg %p213
        $region90: #{tpu_custom_call.1} parent=51 // pred_check_branch
          %1589 = sbr.rel (%p1587) target = $region92
        $region91: #{tpu_custom_call.1} parent=51 // pred_region
          %s1591 = ssub.s32 256, 256
          %1592 = vsyncadd %s1583, %s1591
          %s1593 = smul.addr %s27, 2
          %s1594 = smul.addr %s1593, 128
          %s1595 = scalar_lea.hbm %s8, %s1594
          %s1596 = sshll.u32 %s1586, 4
          %s1597 = int_to_ptr.vmem [resolvable:$true] %s1596
          %1602 = dma.vmem_to_hbm [thread:$0]  %s1597, 256, %s1595, %s1583, 128, 128, 8
        $region92: #{tpu_custom_call.1} parent=51 // pred_fallthru
          _
      $region52: #{tpu_custom_call.1} parent=5 // pred_fallthru
        _
      %p1603 = scmp.le.s32.totalorder 2, %s22
      // Predicated region
      $region93: #{tpu_custom_call.1} parent=5 // pred_check
        %p1604 = pneg %p1603
      $region94: #{tpu_custom_call.1} parent=5 // pred_check_branch
        %1606 = sbr.rel (%p1604) target = $region96
      $region95: #{tpu_custom_call.1} parent=5 // pred_region
        %s1607 = ssub.s32 %s22, 2
        // Predicated region
        $region97: #{tpu_custom_call.1} parent=95 // pred_check
          %p1608 = pneg %p219
        $region98: #{tpu_custom_call.1} parent=95 // pred_check_branch
          %1610 = sbr.rel (%p1608) target = $region100
        $region99: #{tpu_custom_call.1} parent=95 // pred_region
          %s1611 = sand.u32 %s204, 1
          %s1612 = scalar_lea.sflag [#allocation7], %s1611
          %s1613 = sand.u32 %s204, 1
          %s1614 = smul.addr %s1613, 16
          %s1615 = scalar_lea.vmem [#allocation19], %s1614
          %1616 = dma.done %s1612, 256
        $region100: #{tpu_custom_call.1} parent=95 // pred_fallthru
          _
      $region96: #{tpu_custom_call.1} parent=5 // pred_fallthru
        _
    $region6: #{tpu_custom_call.1} parent=1 // loop_footer
      %s26 = sadd.s32 1, %s22
    $region7: #{tpu_custom_call.1} parent=1 // loop_footer_branch
      %21 = sbr.rel target = $region3
    $region8: #{tpu_custom_call.1} parent=1 // loop_exit
      _
    %1617 = vsyncpa [#allocation6], 1
    %s1618 = scalar_lea.sflag [#allocation6], 1
    %1619 = vsyncpa %s1618, 1
    %1620 = vsyncpa [#allocation9], 1
    %1621 = vsyncpa [#allocation12], 1
    %1622 = vsyncpa [#allocation15], 1
    %1623 = vsyncpa [#allocation18], 1
    %1624 = vsyncpa [#allocation7], 1
    %s1625 = scalar_lea.sflag [#allocation7], 1
    %1626 = vsyncpa %s1625, 1

</llo_original>
